<compile_context>
chip_gen: v6e
topology: v6e:2x2x1
jax: 0.10.0
libtpu: 0.0.40
codegen_flags: <defaults>
</compile_context>

<pallas_src>
import functools
import math

import jax
import jax.numpy as jnp
from jax import lax
from jax.experimental import pallas as pl
from jax.experimental.pallas import tpu as pltpu


def _round_up(x, m):
    return ((x + m - 1) // m) * m


def _gelu_tanh(y):
    # tanh-approximate GELU: exp/tanh go to the EUP slot (VALU stays free).
    c = math.sqrt(2.0 / math.pi)
    return 0.5 * y * (1.0 + jnp.tanh(c * (y + 0.044715 * y * y * y)))


def _conv3x3s2_kernel(x_ref, w_ref, b_ref, o_ref, *, L, wop1, apply_gelu):
    """One (batch, row-block) step of the space-to-depth'd 3x3/stride-2 conv.

    x_ref: ( (th+1)*(Wo+1)+8 , 4*Cin )  flattened s2d rows (with 1-row halo)
    w_ref: ( 4, 4*Cin, Cout_p )         per-(dh,dw) weight matrices (BN folded)
    b_ref: ( 1, Cout_p )                folded BN bias (f32)
    o_ref: ( L, Cout_p )                L = th*(Wo+1) rows (1 junk col per row)
    """
    acc = None
    for dh in range(2):
        for dw in range(2):
            s = dh * wop1 + dw                       # static row offset
            lhs = x_ref[s:s + L, :]                  # (L, 4*Cin) bf16
            part = jnp.dot(lhs, w_ref[2 * dh + dw],
                           preferred_element_type=jnp.float32)
            acc = part if acc is None else acc + part
    y = acc + b_ref[...]                             # f32 bias add
    if apply_gelu:
        y = _gelu_tanh(y)
    o_ref[...] = y.astype(o_ref.dtype)


def conv3x3_s2_bn_act(x_nhwc, w_oihw, bn_scale, bn_bias, apply_gelu, *,
                      out_dtype, compute_dtype=jnp.bfloat16,
                      rows_per_block=1024):
    """3x3 conv, stride=2, padding=1, bias=False, folded BN (+ optional GELU)."""
    B, H, W, Cin = x_nhwc.shape
    Cout = w_oihw.shape[0]
    Ho = (H - 1) // 2 + 1
    Wo = (W - 1) // 2 + 1
    Cp = _round_up(Cout, 128)        # lane-dense output channels
    C4 = 4 * Cin                     # space-to-depth channels

    x = x_nhwc.astype(compute_dtype)

    # --- space-to-depth (replaces the materialized im2col) ------------------
    # Pad to exactly (2*(Ho+1), 2*(Wo+1)) with a 1-pixel top/left zero border;
    # the extra bottom/right pixels only ever meet zero weights.
    xp = jnp.pad(x, ((0, 0),
                     (1, 2 * (Ho + 1) - H - 1),
                     (1, 2 * (Wo + 1) - W - 1),
                     (0, 0)))
    xs2d = xp.reshape(B, Ho + 1, 2, Wo + 1, 2, Cin)
    xs2d = xs2d.transpose(0, 1, 3, 2, 4, 5).reshape(B, Ho + 1, Wo + 1, C4)

    # --- row blocking with a one-row halo ------------------------------------
    th = max(1, min(Ho, rows_per_block // max(Wo, 1)))
    nb = pl.cdiv(Ho, th)
    row_pad = nb * th - Ho
    if row_pad:
        xs2d = jnp.pad(xs2d, ((0, 0), (0, row_pad), (0, 0), (0, 0)))
    if nb == 1:
        xb = xs2d[:, None]                           # (B, 1, th+1, Wo+1, C4)
    else:
        idx = jnp.arange(nb)[:, None] * th + jnp.arange(th + 1)[None, :]
        xb = jnp.take(xs2d, idx, axis=1)             # (B, nb, th+1, Wo+1, C4)

    wop1 = Wo + 1
    L = th * wop1                                    # rows computed per block
    xf = xb.reshape(B, nb, (th + 1) * wop1, C4)
    xf = jnp.pad(xf, ((0, 0), (0, 0), (0, 8), (0, 0)))   # slack for the dw=1 taps
    Lin = (th + 1) * wop1 + 8

    # --- weights: (Cout,Cin,3,3) -> 2x2 conv over s2d channels, BN folded ----
    w = jnp.transpose(w_oihw, (2, 3, 1, 0)) * bn_scale[None, None, None, :]
    w4 = jnp.zeros((4, 4, Cin, Cout), w.dtype).at[:3, :3].set(w)
    w2 = w4.reshape(2, 2, 2, 2, Cin, Cout).transpose(0, 2, 1, 3, 4, 5)
    w2 = w2.reshape(4, C4, Cout)
    w2 = jnp.pad(w2, ((0, 0), (0, 0), (0, Cp - Cout))).astype(compute_dtype)
    bias = jnp.pad(bn_bias, (0, Cp - Cout)).reshape(1, Cp).astype(jnp.float32)

    grid = (B, nb)
    out_itemsize = jnp.dtype(out_dtype).itemsize
    cost = pl.CostEstimate(
        flops=2 * B * nb * L * C4 * Cp * 4,
        transcendentals=(B * nb * L * Cp) if apply_gelu else 0,
        bytes_accessed=(xf.size * xf.dtype.itemsize
                        + w2.size * w2.dtype.itemsize
                        + bias.size * 4
                        + B * nb * L * Cp * out_itemsize),
    )
    kernel = functools.partial(_conv3x3s2_kernel, L=L, wop1=wop1,
                               apply_gelu=apply_gelu)

    def make_call(single_buffered_resident):
        resident = (dict(pipeline_mode=pl.Buffered(1))
                    if single_buffered_resident else {})
        return pl.pallas_call(
            kernel,
            out_shape=jax.ShapeDtypeStruct((B, nb, L, Cp), out_dtype),
            grid=grid,
            in_specs=[
                # Activation rows stream through the pipeline.
                pl.BlockSpec((None, None, Lin, C4), lambda b, i: (b, i, 0, 0)),
                # Weights / bias stay VMEM-resident (constant index_map).
                pl.BlockSpec((4, C4, Cp), lambda b, i: (0, 0, 0), **resident),
                pl.BlockSpec((1, Cp), lambda b, i: (0, 0), **resident),
            ],
            out_specs=pl.BlockSpec((None, None, L, Cp),
                                   lambda b, i: (b, i, 0, 0)),
            compiler_params=pltpu.CompilerParams(
                dimension_semantics=("parallel", "parallel"),
                vmem_limit_bytes=48 * 1024 * 1024),
            cost_estimate=cost,
        )

    try:
        out = make_call(True)(xf, w2, bias)
    except Exception:
        # Fallback if this jax build rejects single-buffered resident operands.
        out = make_call(False)(xf, w2, bias)

    # Drop the per-row junk column, padded channels and padded rows.
    out = out.reshape(B, nb, th, wop1, Cp)[:, :, :, :Wo, :Cout]
    out = out.reshape(B, nb * th, Wo, Cout)[:, :Ho]
    return out


def init_conv_patch_embed_params(key, patch_size=16, d_model=32, in_chans=3):
    """Deterministic synthetic params. BatchNorm folded in eval mode."""
    if patch_size == 16:
        chans = [in_chans, d_model // 8, d_model // 4, d_model // 2, d_model]
    elif patch_size == 8:
        chans = [in_chans, d_model // 4, d_model // 2, d_model]
    else:
        raise ValueError("patch_size must be 8 or 16")
    eps = 1e-5
    params = []
    for i in range(len(chans) - 1):
        cin, cout = chans[i], chans[i + 1]
        key, kw, kg, kb, km, kv = jax.random.split(key, 6)
        w = jax.random.normal(kw, (cout, cin, 3, 3), jnp.float32) * (
            1.0 / math.sqrt(cin * 9))
        gamma = 1.0 + 0.1 * jax.random.normal(kg, (cout,), jnp.float32)
        beta = 0.1 * jax.random.normal(kb, (cout,), jnp.float32)
        rmean = 0.1 * jax.random.normal(km, (cout,), jnp.float32)
        rvar = 1.0 + 0.1 * jnp.abs(jax.random.normal(kv, (cout,), jnp.float32))
        scale = gamma / jnp.sqrt(rvar + eps)
        bias = beta - rmean * scale
        params.append((w, scale, bias))
    return params


def conv_patch_embed_forward(x_nchw, params, *, compute_dtype=jnp.bfloat16,
                             rows_per_block=1024):
    """Pallas-backed ConvPatchEmbed.forward. Returns (tokens, (Hp, Wp))."""
    x = jnp.transpose(x_nchw, (0, 2, 3, 1))  # NCHW -> NHWC
    n = len(params)
    for i, (w, s, b) in enumerate(params):
        last = i == n - 1
        x = conv3x3_s2_bn_act(
            x, w, s, b, apply_gelu=not last,
            out_dtype=(jnp.float32 if last else compute_dtype),
            compute_dtype=compute_dtype, rows_per_block=rows_per_block)
    B, Hp, Wp, Cm = x.shape
    tokens = x.reshape(B, Hp * Wp, Cm)   # == flatten(2).transpose(1, 2)
    return tokens, (Hp, Wp)


def reference_forward(x_nchw, params, *, compute_dtype=jnp.bfloat16):
    """Pure-JAX reference (lax.conv) mirroring the kernel's quantization points."""
    x = x_nchw
    n = len(params)
    for i, (w, s, b) in enumerate(params):
        last = i == n - 1
        wf = (w * s[:, None, None, None]).astype(compute_dtype)  # fold BN scale
        y = lax.conv_general_dilated(
            x.astype(compute_dtype), wf, window_strides=(2, 2),
            padding=((1, 1), (1, 1)),
            dimension_numbers=("NCHW", "OIHW", "NCHW"),
            preferred_element_type=jnp.float32)
        y = y + b[None, :, None, None]
        if not last:
            y = _gelu_tanh(y).astype(compute_dtype)
        x = y
    B, C, Hp, Wp = x.shape
    tokens = jnp.transpose(x.reshape(B, C, Hp * Wp), (0, 2, 1))
    return tokens.astype(jnp.float32), (Hp, Wp)


if __name__ == "__main__":
    key = jax.random.PRNGKey(0)
    kx, kp = jax.random.split(key)

    # Small shapes: patch_size=16 path (4 conv stages), img_size=32, d_model=32.
    B, C, H, W = 2, 3, 32, 32
    d_model = 32
    x = jax.random.normal(kx, (B, C, H, W), jnp.float32)
    params = init_conv_patch_embed_params(kp, patch_size=16, d_model=d_model)

    # rows_per_block=96 also exercises the multi-block halo/row-padding path at
    # these tiny shapes (production default is 1024).
    tokens, (Hp, Wp) = conv_patch_embed_forward(x, params, rows_per_block=96)
    tokens = jax.block_until_ready(tokens)

    ref_tokens, (rHp, rWp) = reference_forward(x, params)
    ref_tokens = jax.block_until_ready(ref_tokens)

    assert tokens.shape == (B, Hp * Wp, d_model)
    assert (Hp, Wp) == (rHp, rWp) == (H // 16, W // 16)
    # bf16 operands -> relaxed tolerance vs the (identically quantized) reference.
    assert jnp.allclose(tokens, ref_tokens, atol=2e-2, rtol=2e-2)

    print("KERNEL_OK")
</pallas_src>

<mosaic_0001>
module attributes {stable_mosaic.version = 11 : i64} {
  func.func @_conv3x3s2_kernel(%arg0: i32, %arg1: i32, %arg2: memref<1x1x127x12xbf16, #tpu.memory_space<vmem>>, %arg3: memref<4x12x128xbf16, #tpu.memory_space<vmem>>, %arg4: memref<1x128xf32, #tpu.memory_space<vmem>>, %arg5: memref<1x1x102x128xbf16, #tpu.memory_space<vmem>>) attributes {dimension_semantics = [#tpu.dimension_semantics<parallel>, #tpu.dimension_semantics<parallel>], iteration_bounds = array<i64: 2, 3>, scalar_prefetch = 0 : i64, scratch_operands = 0 : i64, tpu.core_type = #tpu.core_type<tc>, window_params = [{transform_indices = @transform_0, window_bounds = array<i64: 1, 1, 127, 12>}, {pipeline_mode = #tpu.pipeline_mode<synchronous>, transform_indices = @transform_1, window_bounds = array<i64: 4, 12, 128>}, {pipeline_mode = #tpu.pipeline_mode<synchronous>, transform_indices = @transform_2, window_bounds = array<i64: 1, 128>}, {transform_indices = @transform_3, window_bounds = array<i64: 1, 1, 102, 128>}]} {
    %c0 = arith.constant 0 : index
    %c0_0 = arith.constant 0 : index
    %c0_1 = arith.constant 0 : index
    %c0_2 = arith.constant 0 : index
    %0 = vector.load %arg2[%c0, %c0_0, %c0_1, %c0_2] : memref<1x1x127x12xbf16, #tpu.memory_space<vmem>>, vector<1x1x102x12xbf16>
    %1 = vector.shape_cast %0 : vector<1x1x102x12xbf16> to vector<102x12xbf16>
    %c0_3 = arith.constant 0 : index
    %c0_4 = arith.constant 0 : index
    %c0_5 = arith.constant 0 : index
    %2 = vector.load %arg3[%c0_3, %c0_4, %c0_5] : memref<4x12x128xbf16, #tpu.memory_space<vmem>>, vector<1x12x128xbf16>
    %3 = vector.shape_cast %2 : vector<1x12x128xbf16> to vector<12x128xbf16>
    %cst = arith.constant dense<0.000000e+00> : vector<102x128xf32>
    %4 = tpu.matmul %1, %3, %cst {dimension_numbers = #tpu.dot_dimension_numbers<[1], [0], [0], [1], [0, 0, 1, 1], [], []>} : vector<102x12xbf16>, vector<12x128xbf16>, vector<102x128xf32> -> vector<102x128xf32>
    %c0_6 = arith.constant 0 : index
    %c0_7 = arith.constant 0 : index
    %c1 = arith.constant 1 : index
    %c0_8 = arith.constant 0 : index
    %5 = vector.load %arg2[%c0_6, %c0_7, %c1, %c0_8] : memref<1x1x127x12xbf16, #tpu.memory_space<vmem>>, vector<1x1x102x12xbf16>
    %6 = vector.shape_cast %5 : vector<1x1x102x12xbf16> to vector<102x12xbf16>
    %c1_9 = arith.constant 1 : index
    %c0_10 = arith.constant 0 : index
    %c0_11 = arith.constant 0 : index
    %7 = vector.load %arg3[%c1_9, %c0_10, %c0_11] : memref<4x12x128xbf16, #tpu.memory_space<vmem>>, vector<1x12x128xbf16>
    %8 = vector.shape_cast %7 : vector<1x12x128xbf16> to vector<12x128xbf16>
    %cst_12 = arith.constant dense<0.000000e+00> : vector<102x128xf32>
    %9 = tpu.matmul %6, %8, %cst_12 {dimension_numbers = #tpu.dot_dimension_numbers<[1], [0], [0], [1], [0, 0, 1, 1], [], []>} : vector<102x12xbf16>, vector<12x128xbf16>, vector<102x128xf32> -> vector<102x128xf32>
    %10 = arith.addf %4, %9 : vector<102x128xf32>
    %c0_13 = arith.constant 0 : index
    %c0_14 = arith.constant 0 : index
    %c17 = arith.constant 17 : index
    %c0_15 = arith.constant 0 : index
    %11 = vector.load %arg2[%c0_13, %c0_14, %c17, %c0_15] : memref<1x1x127x12xbf16, #tpu.memory_space<vmem>>, vector<1x1x102x12xbf16>
    %12 = vector.shape_cast %11 : vector<1x1x102x12xbf16> to vector<102x12xbf16>
    %c2 = arith.constant 2 : index
    %c0_16 = arith.constant 0 : index
    %c0_17 = arith.constant 0 : index
    %13 = vector.load %arg3[%c2, %c0_16, %c0_17] : memref<4x12x128xbf16, #tpu.memory_space<vmem>>, vector<1x12x128xbf16>
    %14 = vector.shape_cast %13 : vector<1x12x128xbf16> to vector<12x128xbf16>
    %cst_18 = arith.constant dense<0.000000e+00> : vector<102x128xf32>
    %15 = tpu.matmul %12, %14, %cst_18 {dimension_numbers = #tpu.dot_dimension_numbers<[1], [0], [0], [1], [0, 0, 1, 1], [], []>} : vector<102x12xbf16>, vector<12x128xbf16>, vector<102x128xf32> -> vector<102x128xf32>
    %16 = arith.addf %10, %15 : vector<102x128xf32>
    %c0_19 = arith.constant 0 : index
    %c0_20 = arith.constant 0 : index
    %c18 = arith.constant 18 : index
    %c0_21 = arith.constant 0 : index
    %17 = vector.load %arg2[%c0_19, %c0_20, %c18, %c0_21] : memref<1x1x127x12xbf16, #tpu.memory_space<vmem>>, vector<1x1x102x12xbf16>
    %18 = vector.shape_cast %17 : vector<1x1x102x12xbf16> to vector<102x12xbf16>
    %c3 = arith.constant 3 : index
    %c0_22 = arith.constant 0 : index
    %c0_23 = arith.constant 0 : index
    %19 = vector.load %arg3[%c3, %c0_22, %c0_23] : memref<4x12x128xbf16, #tpu.memory_space<vmem>>, vector<1x12x128xbf16>
    %20 = vector.shape_cast %19 : vector<1x12x128xbf16> to vector<12x128xbf16>
    %cst_24 = arith.constant dense<0.000000e+00> : vector<102x128xf32>
    %21 = tpu.matmul %18, %20, %cst_24 {dimension_numbers = #tpu.dot_dimension_numbers<[1], [0], [0], [1], [0, 0, 1, 1], [], []>} : vector<102x12xbf16>, vector<12x128xbf16>, vector<102x128xf32> -> vector<102x128xf32>
    %22 = arith.addf %16, %21 : vector<102x128xf32>
    %c0_25 = arith.constant 0 : index
    %c0_26 = arith.constant 0 : index
    %23 = vector.load %arg4[%c0_25, %c0_26] : memref<1x128xf32, #tpu.memory_space<vmem>>, vector<1x128xf32>
    %24 = vector.broadcast %23 : vector<1x128xf32> to vector<102x128xf32>
    %25 = arith.addf %22, %24 : vector<102x128xf32>
    %cst_27 = arith.constant 5.000000e-01 : f32
    %26 = vector.broadcast %cst_27 : f32 to vector<102x128xf32>
    %27 = arith.mulf %26, %25 : vector<102x128xf32>
    %cst_28 = arith.constant 4.471500e-02 : f32
    %28 = vector.broadcast %cst_28 : f32 to vector<102x128xf32>
    %29 = arith.mulf %28, %25 : vector<102x128xf32>
    %30 = arith.mulf %29, %25 : vector<102x128xf32>
    %31 = arith.mulf %30, %25 : vector<102x128xf32>
    %32 = arith.addf %25, %31 : vector<102x128xf32>
    %cst_29 = arith.constant 0.797884583 : f32
    %33 = vector.broadcast %cst_29 : f32 to vector<102x128xf32>
    %34 = arith.mulf %33, %32 : vector<102x128xf32>
    %35 = math.tanh %34 : vector<102x128xf32>
    %cst_30 = arith.constant 1.000000e+00 : f32
    %36 = vector.broadcast %cst_30 : f32 to vector<102x128xf32>
    %37 = arith.addf %36, %35 : vector<102x128xf32>
    %38 = arith.mulf %27, %37 : vector<102x128xf32>
    %39 = arith.truncf %38 : vector<102x128xf32> to vector<102x128xbf16>
    %c0_31 = arith.constant 0 : index
    %c0_32 = arith.constant 0 : index
    %c0_33 = arith.constant 0 : index
    %c0_34 = arith.constant 0 : index
    %40 = vector.load %arg5[%c0_31, %c0_32, %c0_33, %c0_34] : memref<1x1x102x128xbf16, #tpu.memory_space<vmem>>, vector<1x1x102x128xbf16>
    %41 = vector.shape_cast %40 : vector<1x1x102x128xbf16> to vector<102x128xbf16>
    %42 = vector.shape_cast %39 : vector<102x128xbf16> to vector<1x1x102x128xbf16>
    tpu.vector_store %arg5[%c0_31, %c0_32, %c0_33, %c0_34], %42 {strides = array<i32>} : memref<1x1x102x128xbf16, #tpu.memory_space<vmem>>, vector<1x1x102x128xbf16>,
    return
  }
  func.func @transform_0(%arg0: i32, %arg1: i32) -> (i32, i32, i32, i32) {
    %c0_i32 = arith.constant 0 : i32
    %c0_i32_0 = arith.constant 0 : i32
    %c0_i32_1 = arith.constant 0 : i32
    return %arg0, %arg1, %c0_i32, %c0_i32_0 : i32, i32, i32, i32
  }
  func.func @transform_1(%arg0: i32, %arg1: i32) -> (i32, i32, i32) {
    %c0_i32 = arith.constant 0 : i32
    %c0_i32_0 = arith.constant 0 : i32
    %c0_i32_1 = arith.constant 0 : i32
    %c0_i32_2 = arith.constant 0 : i32
    return %c0_i32, %c0_i32_0, %c0_i32_1 : i32, i32, i32
  }
  func.func @transform_2(%arg0: i32, %arg1: i32) -> (i32, i32) {
    %c0_i32 = arith.constant 0 : i32
    %c0_i32_0 = arith.constant 0 : i32
    %c0_i32_1 = arith.constant 0 : i32
    return %c0_i32, %c0_i32_0 : i32, i32
  }
  func.func @transform_3(%arg0: i32, %arg1: i32) -> (i32, i32, i32, i32) {
    %c0_i32 = arith.constant 0 : i32
    %c0_i32_0 = arith.constant 0 : i32
    %c0_i32_1 = arith.constant 0 : i32
    return %arg0, %arg1, %c0_i32, %c0_i32_0 : i32, i32, i32, i32
  }
}

module attributes {stable_mosaic.version = 11 : i64} {
  func.func @_conv3x3s2_kernel(%arg0: i32, %arg1: i32, %arg2: memref<1x1x127x12xbf16, #tpu.memory_space<vmem>>, %arg3: memref<4x12x128xbf16, #tpu.memory_space<vmem>>, %arg4: memref<1x128xf32, #tpu.memory_space<vmem>>, %arg5: memref<1x1x102x128xbf16, #tpu.memory_space<vmem>>) attributes {dimension_semantics = [#tpu.dimension_semantics<parallel>, #tpu.dimension_semantics<parallel>], iteration_bounds = array<i64: 2, 3>, scalar_prefetch = 0 : i64, scratch_operands = 0 : i64, tpu.core_type = #tpu.core_type<tc>, window_params = [{transform_indices = @transform_0, window_bounds = array<i64: 1, 1, 127, 12>}, {pipeline_mode = #tpu.pipeline_mode<synchronous>, transform_indices = @transform_1, window_bounds = array<i64: 4, 12, 128>}, {pipeline_mode = #tpu.pipeline_mode<synchronous>, transform_indices = @transform_2, window_bounds = array<i64: 1, 128>}, {transform_indices = @transform_3, window_bounds = array<i64: 1, 1, 102, 128>}]} {
    %c0 = arith.constant 0 : index
    %c0_0 = arith.constant 0 : index
    %c0_1 = arith.constant 0 : index
    %c0_2 = arith.constant 0 : index
    %0 = vector.load %arg2[%c0, %c0_0, %c0_1, %c0_2] : memref<1x1x127x12xbf16, #tpu.memory_space<vmem>>, vector<1x1x102x12xbf16>
    %1 = vector.shape_cast %0 : vector<1x1x102x12xbf16> to vector<102x12xbf16>
    %c0_3 = arith.constant 0 : index
    %c0_4 = arith.constant 0 : index
    %c0_5 = arith.constant 0 : index
    %2 = vector.load %arg3[%c0_3, %c0_4, %c0_5] : memref<4x12x128xbf16, #tpu.memory_space<vmem>>, vector<1x12x128xbf16>
    %3 = vector.shape_cast %2 : vector<1x12x128xbf16> to vector<12x128xbf16>
    %cst = arith.constant dense<0.000000e+00> : vector<102x128xf32>
    %4 = tpu.matmul %1, %3, %cst {dimension_numbers = #tpu.dot_dimension_numbers<[1], [0], [0], [1], [0, 0, 1, 1], [], []>} : vector<102x12xbf16>, vector<12x128xbf16>, vector<102x128xf32> -> vector<102x128xf32>
    %c0_6 = arith.constant 0 : index
    %c0_7 = arith.constant 0 : index
    %c1 = arith.constant 1 : index
    %c0_8 = arith.constant 0 : index
    %5 = vector.load %arg2[%c0_6, %c0_7, %c1, %c0_8] : memref<1x1x127x12xbf16, #tpu.memory_space<vmem>>, vector<1x1x102x12xbf16>
    %6 = vector.shape_cast %5 : vector<1x1x102x12xbf16> to vector<102x12xbf16>
    %c1_9 = arith.constant 1 : index
    %c0_10 = arith.constant 0 : index
    %c0_11 = arith.constant 0 : index
    %7 = vector.load %arg3[%c1_9, %c0_10, %c0_11] : memref<4x12x128xbf16, #tpu.memory_space<vmem>>, vector<1x12x128xbf16>
    %8 = vector.shape_cast %7 : vector<1x12x128xbf16> to vector<12x128xbf16>
    %cst_12 = arith.constant dense<0.000000e+00> : vector<102x128xf32>
    %9 = tpu.matmul %6, %8, %cst_12 {dimension_numbers = #tpu.dot_dimension_numbers<[1], [0], [0], [1], [0, 0, 1, 1], [], []>} : vector<102x12xbf16>, vector<12x128xbf16>, vector<102x128xf32> -> vector<102x128xf32>
    %10 = arith.addf %4, %9 : vector<102x128xf32>
    %c0_13 = arith.constant 0 : index
    %c0_14 = arith.constant 0 : index
    %c17 = arith.constant 17 : index
    %c0_15 = arith.constant 0 : index
    %11 = vector.load %arg2[%c0_13, %c0_14, %c17, %c0_15] : memref<1x1x127x12xbf16, #tpu.memory_space<vmem>>, vector<1x1x102x12xbf16>
    %12 = vector.shape_cast %11 : vector<1x1x102x12xbf16> to vector<102x12xbf16>
    %c2 = arith.constant 2 : index
    %c0_16 = arith.constant 0 : index
    %c0_17 = arith.constant 0 : index
    %13 = vector.load %arg3[%c2, %c0_16, %c0_17] : memref<4x12x128xbf16, #tpu.memory_space<vmem>>, vector<1x12x128xbf16>
    %14 = vector.shape_cast %13 : vector<1x12x128xbf16> to vector<12x128xbf16>
    %cst_18 = arith.constant dense<0.000000e+00> : vector<102x128xf32>
    %15 = tpu.matmul %12, %14, %cst_18 {dimension_numbers = #tpu.dot_dimension_numbers<[1], [0], [0], [1], [0, 0, 1, 1], [], []>} : vector<102x12xbf16>, vector<12x128xbf16>, vector<102x128xf32> -> vector<102x128xf32>
    %16 = arith.addf %10, %15 : vector<102x128xf32>
    %c0_19 = arith.constant 0 : index
    %c0_20 = arith.constant 0 : index
    %c18 = arith.constant 18 : index
    %c0_21 = arith.constant 0 : index
    %17 = vector.load %arg2[%c0_19, %c0_20, %c18, %c0_21] : memref<1x1x127x12xbf16, #tpu.memory_space<vmem>>, vector<1x1x102x12xbf16>
    %18 = vector.shape_cast %17 : vector<1x1x102x12xbf16> to vector<102x12xbf16>
    %c3 = arith.constant 3 : index
    %c0_22 = arith.constant 0 : index
    %c0_23 = arith.constant 0 : index
    %19 = vector.load %arg3[%c3, %c0_22, %c0_23] : memref<4x12x128xbf16, #tpu.memory_space<vmem>>, vector<1x12x128xbf16>
    %20 = vector.shape_cast %19 : vector<1x12x128xbf16> to vector<12x128xbf16>
    %cst_24 = arith.constant dense<0.000000e+00> : vector<102x128xf32>
    %21 = tpu.matmul %18, %20, %cst_24 {dimension_numbers = #tpu.dot_dimension_numbers<[1], [0], [0], [1], [0, 0, 1, 1], [], []>} : vector<102x12xbf16>, vector<12x128xbf16>, vector<102x128xf32> -> vector<102x128xf32>
    %22 = arith.addf %16, %21 : vector<102x128xf32>
    %c0_25 = arith.constant 0 : index
    %c0_26 = arith.constant 0 : index
    %23 = vector.load %arg4[%c0_25, %c0_26] : memref<1x128xf32, #tpu.memory_space<vmem>>, vector<1x128xf32>
    %24 = vector.broadcast %23 : vector<1x128xf32> to vector<102x128xf32>
    %25 = arith.addf %22, %24 : vector<102x128xf32>
    %cst_27 = arith.constant 5.000000e-01 : f32
    %26 = vector.broadcast %cst_27 : f32 to vector<102x128xf32>
    %27 = arith.mulf %26, %25 : vector<102x128xf32>
    %cst_28 = arith.constant 4.471500e-02 : f32
    %28 = vector.broadcast %cst_28 : f32 to vector<102x128xf32>
    %29 = arith.mulf %28, %25 : vector<102x128xf32>
    %30 = arith.mulf %29, %25 : vector<102x128xf32>
    %31 = arith.mulf %30, %25 : vector<102x128xf32>
    %32 = arith.addf %25, %31 : vector<102x128xf32>
    %cst_29 = arith.constant 0.797884583 : f32
    %33 = vector.broadcast %cst_29 : f32 to vector<102x128xf32>
    %34 = arith.mulf %33, %32 : vector<102x128xf32>
    %35 = math.tanh %34 : vector<102x128xf32>
    %cst_30 = arith.constant 1.000000e+00 : f32
    %36 = vector.broadcast %cst_30 : f32 to vector<102x128xf32>
    %37 = arith.addf %36, %35 : vector<102x128xf32>
    %38 = arith.mulf %27, %37 : vector<102x128xf32>
    %39 = arith.truncf %38 : vector<102x128xf32> to vector<102x128xbf16>
    %c0_31 = arith.constant 0 : index
    %c0_32 = arith.constant 0 : index
    %c0_33 = arith.constant 0 : index
    %c0_34 = arith.constant 0 : index
    %40 = vector.load %arg5[%c0_31, %c0_32, %c0_33, %c0_34] : memref<1x1x102x128xbf16, #tpu.memory_space<vmem>>, vector<1x1x102x128xbf16>
    %41 = vector.shape_cast %40 : vector<1x1x102x128xbf16> to vector<102x128xbf16>
    %42 = vector.shape_cast %39 : vector<102x128xbf16> to vector<1x1x102x128xbf16>
    tpu.vector_store %arg5[%c0_31, %c0_32, %c0_33, %c0_34], %42 {strides = array<i32>} : memref<1x1x102x128xbf16, #tpu.memory_space<vmem>>, vector<1x1x102x128xbf16>,
    return
  }
  func.func @transform_0(%arg0: i32, %arg1: i32) -> (i32, i32, i32, i32) {
    %c0_i32 = arith.constant 0 : i32
    %c0_i32_0 = arith.constant 0 : i32
    %c0_i32_1 = arith.constant 0 : i32
    return %arg0, %arg1, %c0_i32, %c0_i32_0 : i32, i32, i32, i32
  }
  func.func @transform_1(%arg0: i32, %arg1: i32) -> (i32, i32, i32) {
    %c0_i32 = arith.constant 0 : i32
    %c0_i32_0 = arith.constant 0 : i32
    %c0_i32_1 = arith.constant 0 : i32
    %c0_i32_2 = arith.constant 0 : i32
    return %c0_i32, %c0_i32_0, %c0_i32_1 : i32, i32, i32
  }
  func.func @transform_2(%arg0: i32, %arg1: i32) -> (i32, i32) {
    %c0_i32 = arith.constant 0 : i32
    %c0_i32_0 = arith.constant 0 : i32
    %c0_i32_1 = arith.constant 0 : i32
    return %c0_i32, %c0_i32_0 : i32, i32
  }
  func.func @transform_3(%arg0: i32, %arg1: i32) -> (i32, i32, i32, i32) {
    %c0_i32 = arith.constant 0 : i32
    %c0_i32_0 = arith.constant 0 : i32
    %c0_i32_1 = arith.constant 0 : i32
    return %arg0, %arg1, %c0_i32, %c0_i32_0 : i32, i32, i32, i32
  }
}

</mosaic_0001>

<llo_original>
// kernel: tpu_custom_call.1
$region0: #{tpu_custom_call.1}
  #allocation0 [shape = 'u32[]', space=smem, size = 0x4, offset = 0x4, fixed_abs, tag = 'smem constant byte address 0x4 - core index']
  #allocation1 [shape = 'u32[144,128]{1,0:T(1,128)}', space=vmem, size = 0x12000, scoped, tag = 'internal scratch']
  %s0 = inlined_call_operand.vmem [shape: bf16[2,3,127,12], index: 0, kind: input, shape index: {}]
  %s1 = inlined_call_operand.vmem [shape: bf16[4,12,128], index: 1, kind: input, shape index: {}]
  %s2 = inlined_call_operand.vmem [shape: f32[1,128], index: 2, kind: input, shape index: {}]
  %s3 = inlined_call_operand.vmem [shape: bf16[2,3,102,128], index: 3, kind: output, shape index: {}]
  %s4 = sld [smem:[#allocation0]]
  $region45: #{tpu_custom_call.1} parent=0
    _
  %s6 = ssub.s32 1, %s4
  %s7 = scalar_select 0, %s6, %s4
  loop: start=0, step=1, limit=8
  $region2: #{tpu_custom_call.1} parent=0 // loop_pre_header
    _
  $region3: #{tpu_custom_call.1} parent=0 // loop_header
    %s9 = sphi 0, %s13
    %p10 = scmp.ge.s32.totalorder %s9, 8
    %s16 = sphi 0, %s28
    %s17 = sphi 0, %s24
    %s18 = sphi 0, %s16
    %s19 = sphi 0, %s17
    %s20 = sphi 0, %s18
    %s21 = sphi 0, %s19
    %s33 = sphi 0, %s35
    %s36 = sphi 0, %s33
    %s37 = sphi 0, %s36
    %s53 = sphi 0, %s37
    %s57 = sphi 0, %s57
    %s59 = sphi 0, %s57
    %s60 = sphi 0, %s59
    %s74 = sphi 0, %s60
    %s78 = sphi 0, %s78
    %s80 = sphi 0, %s78
    %s81 = sphi 0, %s80
    %s95 = sphi 0, %s81
    %s103 = sphi 0, %s105
    %s106 = sphi 0, %s103
    %s107 = sphi 0, %s106
    %s123 = sphi 0, %s107
  $region4: #{tpu_custom_call.1} parent=0 // loop_header_branch
    %12 = sbr.rel (%p10) target = $region8
  $region5: #{tpu_custom_call.1} parent=0 // loop_body
    %s14 = ssub.s32 %s9, 1
    %s15 = ssub.s32 %s9, 2
    %s22 = sadd.s32 1, %s17
    %p23 = scmp.ge.s32.totalorder %s22, 3
    %s24 = scalar_select %p23, 0, %s22
    %s25 = sadd.s32 1, %s16
    %s26 = scalar_select %p23, %s25, %s16
    %p27 = scmp.ge.s32.totalorder %s26, 2
    %s28 = scalar_select %p27, 0, %s26
    %s29 = ssub.s32 %s16, %s28
    %s30 = ssub.s32 %s17, %s24
    %s31 = sor.u32 %s29, %s30
    %p32 = scmp.eq.s32.totalorder %s31, 0
    %s34 = sadd.s32 %s33, 1
    %s35 = scalar_select %p32, %s33, %s34
    %p38 = pneg %p32
    %p39 = scmp.eq.s32.totalorder %s9, 5
    %p40 = por %p38, %p39
    %p41 = scmp.ne.s32.totalorder %s33, %s36
    %p42 = scmp.eq.s32.totalorder %s9, 0
    %p43 = por %p41, %p42
    %p44 = scmp.ne.s32.totalorder %s33, %s36
    %p45 = scmp.eq.s32.totalorder %s14, 5
    %p46 = por %p44, %p45
    %p47 = scmp.ne.s32.totalorder %s36, %s37
    %p48 = scmp.eq.s32.totalorder %s14, 0
    %p49 = por %p47, %p48
    %p50 = scmp.ne.s32.totalorder %s36, %s37
    %p51 = scmp.eq.s32.totalorder %s15, 5
    %p52 = por %p50, %p51
    %p54 = scmp.ne.s32.totalorder %s37, %s53
    %p55 = scmp.eq.s32.totalorder %s15, 0
    %p56 = por %p54, %p55
    %s58 = sadd.s32 %s57, 1
    %p61 = scmp.eq.s32.totalorder %s9, 5
    %p62 = scmp.ne.s32.totalorder %s57, %s59
    %p63 = scmp.eq.s32.totalorder %s9, 0
    %p64 = por %p62, %p63
    %p65 = scmp.ne.s32.totalorder %s57, %s59
    %p66 = scmp.eq.s32.totalorder %s14, 5
    %p67 = por %p65, %p66
    %p68 = scmp.ne.s32.totalorder %s59, %s60
    %p69 = scmp.eq.s32.totalorder %s14, 0
    %p70 = por %p68, %p69
    %p71 = scmp.ne.s32.totalorder %s59, %s60
    %p72 = scmp.eq.s32.totalorder %s15, 5
    %p73 = por %p71, %p72
    %p75 = scmp.ne.s32.totalorder %s60, %s74
    %p76 = scmp.eq.s32.totalorder %s15, 0
    %p77 = por %p75, %p76
    %s79 = sadd.s32 %s78, 1
    %p82 = scmp.eq.s32.totalorder %s9, 5
    %p83 = scmp.ne.s32.totalorder %s78, %s80
    %p84 = scmp.eq.s32.totalorder %s9, 0
    %p85 = por %p83, %p84
    %p86 = scmp.ne.s32.totalorder %s78, %s80
    %p87 = scmp.eq.s32.totalorder %s14, 5
    %p88 = por %p86, %p87
    %p89 = scmp.ne.s32.totalorder %s80, %s81
    %p90 = scmp.eq.s32.totalorder %s14, 0
    %p91 = por %p89, %p90
    %p92 = scmp.ne.s32.totalorder %s80, %s81
    %p93 = scmp.eq.s32.totalorder %s15, 5
    %p94 = por %p92, %p93
    %p96 = scmp.ne.s32.totalorder %s81, %s95
    %p97 = scmp.eq.s32.totalorder %s15, 0
    %p98 = por %p96, %p97
    %s99 = ssub.s32 %s16, %s28
    %s100 = ssub.s32 %s17, %s24
    %s101 = sor.u32 %s99, %s100
    %p102 = scmp.eq.s32.totalorder %s101, 0
    %s104 = sadd.s32 %s103, 1
    %s105 = scalar_select %p102, %s103, %s104
    %p108 = pneg %p102
    %p109 = scmp.eq.s32.totalorder %s9, 5
    %p110 = por %p108, %p109
    %p111 = scmp.ne.s32.totalorder %s103, %s106
    %p112 = scmp.eq.s32.totalorder %s9, 0
    %p113 = por %p111, %p112
    %p114 = scmp.ne.s32.totalorder %s103, %s106
    %p115 = scmp.eq.s32.totalorder %s14, 5
    %p116 = por %p114, %p115
    %p117 = scmp.ne.s32.totalorder %s106, %s107
    %p118 = scmp.eq.s32.totalorder %s14, 0
    %p119 = por %p117, %p118
    %p120 = scmp.ne.s32.totalorder %s106, %s107
    %p121 = scmp.eq.s32.totalorder %s15, 5
    %p122 = por %p120, %p121
    %p124 = scmp.ne.s32.totalorder %s107, %s123
    %p125 = scmp.eq.s32.totalorder %s15, 0
    %p126 = por %p124, %p125
    %p127 = scmp.le.s32.totalorder 1, %s9
    %p128 = scmp.lt.s32.totalorder %s9, 7
    %p129 = pnand %p127, %p128
    %p130 = pneg %p129
    // Predicated region
    $region9: #{tpu_custom_call.1} parent=5 // pred_check
      _
    $region10: #{tpu_custom_call.1} parent=5 // pred_check_branch
      %132 = sbr.rel (%p129) target = $region12
    $region11: #{tpu_custom_call.1} parent=5 // pred_region
      %s133 = ssub.s32 %s9, 1
      // Predicated region
      $region13: #{tpu_custom_call.1} parent=11 // pred_check
        %p134 = pneg %p70
      $region14: #{tpu_custom_call.1} parent=11 // pred_check_branch
        %136 = sbr.rel (%p134) target = $region16
      $region15: #{tpu_custom_call.1} parent=11 // pred_region
        _
      $region16: #{tpu_custom_call.1} parent=11 // pred_fallthru
        _
      // Predicated region
      $region17: #{tpu_custom_call.1} parent=11 // pred_check
        %p137 = pneg %p91
      $region18: #{tpu_custom_call.1} parent=11 // pred_check_branch
        %139 = sbr.rel (%p137) target = $region20
      $region19: #{tpu_custom_call.1} parent=11 // pred_region
        _
      $region20: #{tpu_custom_call.1} parent=11 // pred_fallthru
        _
    $region12: #{tpu_custom_call.1} parent=5 // pred_fallthru
      _
    %p140 = scmp.lt.s32.totalorder %s9, 6
    // Predicated region
    $region21: #{tpu_custom_call.1} parent=5 // pred_check
      %p141 = pneg %p140
    $region22: #{tpu_custom_call.1} parent=5 // pred_check_branch
      %143 = sbr.rel (%p141) target = $region24
    $region23: #{tpu_custom_call.1} parent=5 // pred_region
      // Predicated region
      $region25: #{tpu_custom_call.1} parent=23 // pred_check
        %p144 = pneg %p43
      $region26: #{tpu_custom_call.1} parent=23 // pred_check_branch
        %146 = sbr.rel (%p144) target = $region28
      $region27: #{tpu_custom_call.1} parent=23 // pred_region
        %p147 = scmp.lt.s32.totalorder %s16, 1
        %s148 = scalar_select %p147, %s16, 1
        %p149 = scmp.lt.s32.totalorder %s17, 2
        %s150 = scalar_select %p149, %s17, 2
        %s151 = smul.addr %s150, 16
        %s152 = smul.addr %s148, 48
        %s153 = sadd.s32 %s151, %s152
        %s154 = smul.addr %s153, 4
        %s155 = scalar_lea.vmem %s0, %s154
      $region28: #{tpu_custom_call.1} parent=23 // pred_fallthru
        _
    $region24: #{tpu_custom_call.1} parent=5 // pred_fallthru
      _
    %p156 = scmp.le.s32.totalorder 1, %s9
    %p157 = scmp.lt.s32.totalorder %s9, 7
    %p158 = pnand %p156, %p157
    %p159 = pneg %p158
    // Predicated region
    $region29: #{tpu_custom_call.1} parent=5 // pred_check
      _
    $region30: #{tpu_custom_call.1} parent=5 // pred_check_branch
      %161 = sbr.rel (%p158) target = $region32
    $region31: #{tpu_custom_call.1} parent=5 // pred_region
      %s162 = ssub.s32 %s9, 1
      %p163 = scmp.lt.s32.totalorder %s18, 1
      %s164 = scalar_select %p163, %s18, 1
      %p165 = scmp.lt.s32.totalorder %s19, 2
      %s166 = scalar_select %p165, %s19, 2
      %s167 = smul.addr %s166, 16
      %s168 = smul.addr %s164, 48
      %s169 = sadd.s32 %s167, %s168
      %s170 = smul.addr %s169, 4
      %s171 = scalar_lea.vmem %s0, %s170
      %p172 = pneg %p49
      %p173 = pneg %p46
      %p174 = pneg %p70
      %p175 = pneg %p67
      %p176 = pneg %p91
      %p177 = pneg %p88
      %p178 = pneg %p119
      %p179 = pneg %p116
      %p180 = scmp.lt.s32.totalorder %s18, 1
      %s181 = scalar_select %p180, %s18, 1
      %p182 = scmp.lt.s32.totalorder %s19, 2
      %s183 = scalar_select %p182, %s19, 2
      %s184 = smul.addr %s183, 13
      %s185 = smul.addr %s181, 39
      %s186 = sadd.s32 %s184, %s185
      %s187 = smul.addr %s186, 4
      %s188 = scalar_lea.vmem %s3, %s187
      %p189 = scmp.lt.s32.totalorder %s18, 1
      %s190 = scalar_select %p189, %s18, 1
      %p191 = scmp.lt.s32.totalorder %s19, 2
      %s192 = scalar_select %p191, %s19, 2
      %s193 = smul.addr %s192, 16
      %s194 = smul.addr %s190, 48
      %s195 = sadd.s32 %s193, %s194
      %s196 = smul.addr %s195, 4
      %s197 = scalar_lea.vmem %s0, %s196
      %p198 = scmp.lt.s32.totalorder %s18, 1
      %s199 = scalar_select %p198, %s18, 1
      %p200 = scmp.lt.s32.totalorder %s19, 2
      %s201 = scalar_select %p200, %s19, 2
      %s202 = smul.addr %s201, 13
      %s203 = smul.addr %s199, 39
      %s204 = sadd.s32 %s202, %s203
      %s205 = smul.addr %s204, 4
      %s206 = scalar_lea.vmem %s3, %s205
      %v208 = vld [vmem:[%s197] sm:$0xf]
      %v209 = vld [vmem:[%s197 + $0x4] sm:$0xf]
      %v210 = vld [vmem:[%s197 + $0x8] sm:$0xf]
      %v211 = vld [vmem:[%s197 + $0xc] sm:$0xf]
      %v212 = vld [vmem:[%s197 + $0x10] sm:$0xf]
      %v213 = vld [vmem:[%s197 + $0x14] sm:$0xf]
      %v214 = vld [vmem:[%s197 + $0x18] sm:$0xf]
      %v215 = vld [vmem:[%s197 + $0x1c] sm:$0xf]
      %v216 = vld [vmem:[%s197 + $0x20] sm:$0xf]
      %v217 = vld [vmem:[%s197 + $0x24] sm:$0xf]
      %v218 = vld [vmem:[%s197 + $0x28] sm:$0xf]
      %v219 = vld [vmem:[%s197 + $0x2c] sm:$0xf]
      %v220 = vld [vmem:[%s197 + $0x30] sm:$0x7]
      %v221 = vld [vmem:[%s1] sm:$0xf]
      %v222 = vld [vmem:[%s1 + $0x4] sm:$0x3]
      %v223 = vld [vmem:[%s197 + $0x30] sm:$0xf]
      %s224 = scalar_lea.vmem %s1, 8
      %v225 = vld [vmem:[%s224] sm:$0xf]
      %v226 = vld [vmem:[%s224 + $0x4] sm:$0x3]
      %v240 = vunpack.c.l.b16 %v208
      %v241 = vunpack.c.l.b16 %v209
      %v242 = vunpack.c.l.b16 %v210
      %v243 = vunpack.c.l.b16 %v211
      %v244 = vunpack.c.l.b16 %v212
      %v245 = vunpack.c.l.b16 %v213
      %v246 = vunpack.c.l.b16 %v214
      %v247 = vunpack.c.l.b16 %v215
      %v248 = vunpack.c.l.b16 %v216
      %v249 = vunpack.c.l.b16 %v217
      %v250 = vunpack.c.l.b16 %v218
      %v251 = vunpack.c.l.b16 %v219
      %v252 = vunpack.c.l.b16 %v223
      %v253 = vpack.c.b16 %v241, %v240
      %v254 = vpack.c.b16 %v243, %v242
      %v255 = vpack.c.b16 %v245, %v244
      %v256 = vpack.c.b16 %v247, %v246
      %v257 = vpack.c.b16 %v249, %v248
      %v258 = vpack.c.b16 %v251, %v250
      %v259 = vpack.c.b16 %v252, %v252
      %vm260 = vsmask.f32 7424
      %v262 = vshrl.u32 %v253, 16
      %v264 = vshll.u32 %v253, 16
      %v266 = vrot.slane %v264, 1
      %v267 = vor.u32 %v262, %v266
      %v269 = vshll.u32 %v254, 16
      %v271 = vrot.slane %v269, 1
      %v272 = vsel %vm260, %v267, %v271
      %v273 = vshrl.u32 %v254, 16
      %v275 = vor.u32 %v273, %v271
      %v277 = vshll.u32 %v255, 16
      %v279 = vrot.slane %v277, 1
      %v280 = vsel %vm260, %v275, %v279
      %v281 = vshrl.u32 %v255, 16
      %v283 = vor.u32 %v281, %v279
      %v285 = vshll.u32 %v256, 16
      %v287 = vrot.slane %v285, 1
      %v288 = vsel %vm260, %v283, %v287
      %v289 = vshrl.u32 %v256, 16
      %v291 = vor.u32 %v289, %v287
      %v293 = vshll.u32 %v257, 16
      %v295 = vrot.slane %v293, 1
      %v296 = vsel %vm260, %v291, %v295
      %v297 = vshrl.u32 %v257, 16
      %v299 = vor.u32 %v297, %v295
      %v301 = vshll.u32 %v258, 16
      %v303 = vrot.slane %v301, 1
      %v304 = vsel %vm260, %v299, %v303
      %v305 = vshrl.u32 %v258, 16
      %v307 = vor.u32 %v305, %v303
      %v309 = vshll.u32 %v259, 16
      %v311 = vrot.slane %v309, 1
      %v312 = vsel %vm260, %v307, %v311
      %v313 = vshrl.u32 %v259, 16
      %v315 = vor.u32 %v313, %v311
      %v318 = vunpack.c.l.b16 %v225
      %v319 = vunpack.c.l.b16 %v226
      %v320 = vpack.c.b16 %v319, %v318
      %vm321 = vcmask 97280
      %v323 = vsel %vm321, %v272, 0
      %v326 = vsel %vm321, %v280, 0
      %v329 = vsel %vm321, %v288, 0
      %v332 = vsel %vm321, %v296, 0
      %v335 = vsel %vm321, %v304, 0
      %v338 = vsel %vm321, %v312, 0
      %v341 = vsel %vm321, %v315, 0
      %vm343 = vcmask 1045504
      %v345 = vsel %vm343, %v320, 0
      %347 = vmatprep.subr.bf16.mxu0 0
      %348 = vmatpush1.bf16.msra.mxu0 0
      %349 = vmatprep.subr.bf16.mxu0 0
      %350 = vmatpush1.bf16.msra.mxu0 0
      %351 = vmatprep.subr.bf16.mxu0 0
      %352 = vmatpush1.bf16.msra.mxu0 0
      %353 = vmatprep.subr.bf16.mxu0 0
      %354 = vmatpush1.bf16.msra.mxu0 0
      %355 = vmatprep.subr.bf16.mxu0 0
      %356 = vmatpush1.bf16.msra.mxu0 0
      %357 = vmatprep.subr.bf16.mxu0 0
      %358 = vmatpush1.bf16.msra.mxu0 0
      %359 = vmatprep.subr.bf16.mxu0 0
      %360 = vmatpush1.bf16.msra.mxu0 0
      %361 = vmatprep.subr.bf16.mxu0 0
      %362 = vmatpush1.bf16.msra.mxu0 %v345
      %363 = vmatprep.subr.bf16.mxu0 0
      %364 = vmatpush2.bf16.msra.mxu0 0
      %365 = vmatprep.subr.bf16.mxu0 0
      %366 = vmatpush2.bf16.msra.mxu0 0
      %367 = vmatprep.subr.bf16.mxu0 0
      %368 = vmatpush2.bf16.msra.mxu0 0
      %369 = vmatprep.subr.bf16.mxu0 0
      %370 = vmatpush2.bf16.msra.mxu0 0
      %371 = vmatprep.subr.bf16.mxu0 0
      %372 = vmatpush2.bf16.msra.mxu0 0
      %373 = vmatprep.subr.bf16.mxu0 0
      %374 = vmatpush2.bf16.msra.mxu0 0
      %375 = vmatprep.subr.bf16.mxu0 0
      %376 = vmatpush2.bf16.msra.mxu0 0
      %377 = vmatprep.subr.bf16.mxu0 0
      %378 = vmatpush2.bf16.msra.mxu0 0
      %379 = vmatprep.mubr.bf16.mxu0 0
      %380 = vmatmul.mubr.bf16.gmra.mxu0 %v323
      %v381 = vpop.f32.mrf.mxu0
      %v382 = vadd.f32 0.0, %v381
      %v383 = vpop.f32.mrf.mxu0
      %v384 = vpop.f32.mrf.mxu0
      %v385 = vadd.f32 0.0, %v384
      %v386 = vpop.f32.mrf.mxu0
      %387 = vmatprep.mubr.bf16.mxu0 0
      %388 = vmatmul.mubr.bf16.gmra.mxu0 %v326
      %v389 = vpop.f32.mrf.mxu0
      %v390 = vadd.f32 0.0, %v389
      %v391 = vpop.f32.mrf.mxu0
      %v392 = vpop.f32.mrf.mxu0
      %v393 = vadd.f32 0.0, %v392
      %v394 = vpop.f32.mrf.mxu0
      %395 = vmatprep.mubr.bf16.mxu0 0
      %396 = vmatmul.mubr.bf16.gmra.mxu0 %v329
      %v397 = vpop.f32.mrf.mxu0
      %v398 = vadd.f32 0.0, %v397
      %v399 = vpop.f32.mrf.mxu0
      %v400 = vpop.f32.mrf.mxu0
      %v401 = vadd.f32 0.0, %v400
      %v402 = vpop.f32.mrf.mxu0
      %403 = vmatprep.mubr.bf16.mxu0 0
      %404 = vmatmul.mubr.bf16.gmra.mxu0 %v332
      %v405 = vpop.f32.mrf.mxu0
      %v406 = vadd.f32 0.0, %v405
      %v407 = vpop.f32.mrf.mxu0
      %v408 = vpop.f32.mrf.mxu0
      %v409 = vadd.f32 0.0, %v408
      %v410 = vpop.f32.mrf.mxu0
      %411 = vmatprep.mubr.bf16.mxu0 0
      %412 = vmatmul.mubr.bf16.gmra.mxu0 %v335
      %v413 = vpop.f32.mrf.mxu0
      %v414 = vadd.f32 0.0, %v413
      %v415 = vpop.f32.mrf.mxu0
      %v416 = vpop.f32.mrf.mxu0
      %v417 = vadd.f32 0.0, %v416
      %v418 = vpop.f32.mrf.mxu0
      %419 = vmatprep.mubr.bf16.mxu0 0
      %420 = vmatmul.mubr.bf16.gmra.mxu0 %v338
      %v421 = vpop.f32.mrf.mxu0
      %v422 = vadd.f32 0.0, %v421
      %v423 = vpop.f32.mrf.mxu0
      %v424 = vpop.f32.mrf.mxu0
      %v425 = vadd.f32 0.0, %v424
      %v426 = vpop.f32.mrf.mxu0
      %427 = vmatprep.mubr.bf16.mxu0 0
      %428 = vmatmul.mubr.bf16.gmra.mxu0 %v341
      %v429 = vpop.f32.mrf.mxu0
      %v430 = vadd.f32 0.0, %v429
      %v431 = vpop.f32.mrf.mxu0
      %v432 = vpop.f32.mrf.mxu0
      %v433 = vpop.f32.mrf.mxu0
      %434 = vdwg.mxu0
      %v436 = vunpack.c.l.b16 %v220
      %v437 = vpack.c.b16 %v436, %v436
      %v440 = vunpack.c.l.b16 %v221
      %v441 = vunpack.c.l.b16 %v222
      %v442 = vpack.c.b16 %v441, %v440
      %v443 = vsel %vm321, %v253, 0
      %v445 = vsel %vm321, %v254, 0
      %v447 = vsel %vm321, %v255, 0
      %v449 = vsel %vm321, %v256, 0
      %v451 = vsel %vm321, %v257, 0
      %v453 = vsel %vm321, %v258, 0
      %v456 = vsel %vm321, %v437, 0
      %v459 = vsel %vm343, %v442, 0
      %461 = vmatprep.subr.bf16.mxu0 0
      %462 = vmatpush1.bf16.msra.mxu0 0
      %463 = vmatprep.subr.bf16.mxu0 0
      %464 = vmatpush1.bf16.msra.mxu0 0
      %465 = vmatprep.subr.bf16.mxu0 0
      %466 = vmatpush1.bf16.msra.mxu0 0
      %467 = vmatprep.subr.bf16.mxu0 0
      %468 = vmatpush1.bf16.msra.mxu0 0
      %469 = vmatprep.subr.bf16.mxu0 0
      %470 = vmatpush1.bf16.msra.mxu0 0
      %471 = vmatprep.subr.bf16.mxu0 0
      %472 = vmatpush1.bf16.msra.mxu0 0
      %473 = vmatprep.subr.bf16.mxu0 0
      %474 = vmatpush1.bf16.msra.mxu0 0
      %475 = vmatprep.subr.bf16.mxu0 0
      %476 = vmatpush1.bf16.msra.mxu0 %v459
      %477 = vmatprep.subr.bf16.mxu0 0
      %478 = vmatpush2.bf16.msra.mxu0 0
      %479 = vmatprep.subr.bf16.mxu0 0
      %480 = vmatpush2.bf16.msra.mxu0 0
      %481 = vmatprep.subr.bf16.mxu0 0
      %482 = vmatpush2.bf16.msra.mxu0 0
      %483 = vmatprep.subr.bf16.mxu0 0
      %484 = vmatpush2.bf16.msra.mxu0 0
      %485 = vmatprep.subr.bf16.mxu0 0
      %486 = vmatpush2.bf16.msra.mxu0 0
      %487 = vmatprep.subr.bf16.mxu0 0
      %488 = vmatpush2.bf16.msra.mxu0 0
      %489 = vmatprep.subr.bf16.mxu0 0
      %490 = vmatpush2.bf16.msra.mxu0 0
      %491 = vmatprep.subr.bf16.mxu0 0
      %492 = vmatpush2.bf16.msra.mxu0 0
      %493 = vmatprep.mubr.bf16.mxu0 0
      %494 = vmatmul.mubr.bf16.gmra.mxu0 %v443
      %v495 = vpop.f32.mrf.mxu0
      %v496 = vadd.f32 %v382, %v495
      %v497 = vpop.f32.mrf.mxu0
      %v498 = vpop.f32.mrf.mxu0
      %v499 = vadd.f32 %v385, %v498
      %v500 = vpop.f32.mrf.mxu0
      %501 = vmatprep.mubr.bf16.mxu0 0
      %502 = vmatmul.mubr.bf16.gmra.mxu0 %v445
      %v503 = vpop.f32.mrf.mxu0
      %v504 = vadd.f32 %v390, %v503
      %v505 = vpop.f32.mrf.mxu0
      %v506 = vpop.f32.mrf.mxu0
      %v507 = vadd.f32 %v393, %v506
      %v508 = vpop.f32.mrf.mxu0
      %509 = vmatprep.mubr.bf16.mxu0 0
      %510 = vmatmul.mubr.bf16.gmra.mxu0 %v447
      %v511 = vpop.f32.mrf.mxu0
      %v512 = vadd.f32 %v398, %v511
      %v513 = vpop.f32.mrf.mxu0
      %v514 = vpop.f32.mrf.mxu0
      %v515 = vadd.f32 %v401, %v514
      %v516 = vpop.f32.mrf.mxu0
      %517 = vmatprep.mubr.bf16.mxu0 0
      %518 = vmatmul.mubr.bf16.gmra.mxu0 %v449
      %v519 = vpop.f32.mrf.mxu0
      %v520 = vadd.f32 %v406, %v519
      %v521 = vpop.f32.mrf.mxu0
      %v522 = vpop.f32.mrf.mxu0
      %v523 = vadd.f32 %v409, %v522
      %v524 = vpop.f32.mrf.mxu0
      %525 = vmatprep.mubr.bf16.mxu0 0
      %526 = vmatmul.mubr.bf16.gmra.mxu0 %v451
      %v527 = vpop.f32.mrf.mxu0
      %v528 = vadd.f32 %v414, %v527
      %v529 = vpop.f32.mrf.mxu0
      %v530 = vpop.f32.mrf.mxu0
      %v531 = vadd.f32 %v417, %v530
      %v532 = vpop.f32.mrf.mxu0
      %533 = vmatprep.mubr.bf16.mxu0 0
      %534 = vmatmul.mubr.bf16.gmra.mxu0 %v453
      %v535 = vpop.f32.mrf.mxu0
      %v536 = vadd.f32 %v422, %v535
      %v537 = vpop.f32.mrf.mxu0
      %v538 = vpop.f32.mrf.mxu0
      %v539 = vadd.f32 %v425, %v538
      %v540 = vpop.f32.mrf.mxu0
      %541 = vmatprep.mubr.bf16.mxu0 0
      %542 = vmatmul.mubr.bf16.gmra.mxu0 %v456
      %v543 = vpop.f32.mrf.mxu0
      %v544 = vadd.f32 %v430, %v543
      %v545 = vpop.f32.mrf.mxu0
      %v546 = vpop.f32.mrf.mxu0
      %v547 = vpop.f32.mrf.mxu0
      %548 = vdwg.mxu0
      %v549 = vld [vmem:[%s197 + $0x8] sm:$0xf]
      %v550 = vld [vmem:[%s197 + $0xc] sm:$0xf]
      %v551 = vld [vmem:[%s197 + $0x10] sm:$0xf]
      %v552 = vld [vmem:[%s197 + $0x14] sm:$0xf]
      %v553 = vld [vmem:[%s197 + $0x18] sm:$0xf]
      %v554 = vld [vmem:[%s197 + $0x1c] sm:$0xf]
      %v555 = vld [vmem:[%s197 + $0x20] sm:$0xf]
      %v556 = vld [vmem:[%s197 + $0x24] sm:$0xf]
      %v557 = vld [vmem:[%s197 + $0x28] sm:$0xf]
      %v558 = vld [vmem:[%s197 + $0x2c] sm:$0xf]
      %v559 = vld [vmem:[%s197 + $0x30] sm:$0xf]
      %v560 = vld [vmem:[%s197 + $0x34] sm:$0xf]
      %v561 = vld [vmem:[%s197 + $0x38] sm:$0xf]
      %s562 = scalar_lea.vmem %s1, 16
      %v563 = vld [vmem:[%s562] sm:$0xf]
      %v564 = vld [vmem:[%s562 + $0x4] sm:$0x3]
      %v578 = vunpack.c.l.b16 %v549
      %v579 = vunpack.c.l.b16 %v550
      %v580 = vunpack.c.l.b16 %v551
      %v581 = vunpack.c.l.b16 %v552
      %v582 = vunpack.c.l.b16 %v553
      %v583 = vunpack.c.l.b16 %v554
      %v584 = vunpack.c.l.b16 %v555
      %v585 = vunpack.c.l.b16 %v556
      %v586 = vunpack.c.l.b16 %v557
      %v587 = vunpack.c.l.b16 %v558
      %v588 = vunpack.c.l.b16 %v559
      %v589 = vunpack.c.l.b16 %v560
      %v590 = vunpack.c.l.b16 %v561
      %v591 = vpack.c.b16 %v579, %v578
      %v592 = vpack.c.b16 %v581, %v580
      %v593 = vpack.c.b16 %v583, %v582
      %v594 = vpack.c.b16 %v585, %v584
      %v595 = vpack.c.b16 %v587, %v586
      %v596 = vpack.c.b16 %v589, %v588
      %v597 = vpack.c.b16 %v590, %v590
      %v599 = vshrl.u32 %v591, 16
      %v601 = vshll.u32 %v591, 16
      %v603 = vrot.slane %v601, 1
      %v604 = vor.u32 %v599, %v603
      %v606 = vshll.u32 %v592, 16
      %v608 = vrot.slane %v606, 1
      %v609 = vsel %vm260, %v604, %v608
      %v610 = vshrl.u32 %v592, 16
      %v612 = vor.u32 %v610, %v608
      %v614 = vshll.u32 %v593, 16
      %v616 = vrot.slane %v614, 1
      %v617 = vsel %vm260, %v612, %v616
      %v618 = vshrl.u32 %v593, 16
      %v620 = vor.u32 %v618, %v616
      %v622 = vshll.u32 %v594, 16
      %v624 = vrot.slane %v622, 1
      %v625 = vsel %vm260, %v620, %v624
      %v626 = vshrl.u32 %v594, 16
      %v628 = vor.u32 %v626, %v624
      %v630 = vshll.u32 %v595, 16
      %v632 = vrot.slane %v630, 1
      %v633 = vsel %vm260, %v628, %v632
      %v634 = vshrl.u32 %v595, 16
      %v636 = vor.u32 %v634, %v632
      %v638 = vshll.u32 %v596, 16
      %v640 = vrot.slane %v638, 1
      %v641 = vsel %vm260, %v636, %v640
      %v642 = vshrl.u32 %v596, 16
      %v644 = vor.u32 %v642, %v640
      %v646 = vshll.u32 %v597, 16
      %v648 = vrot.slane %v646, 1
      %v649 = vsel %vm260, %v644, %v648
      %v650 = vshrl.u32 %v597, 16
      %v652 = vor.u32 %v650, %v648
      %v655 = vunpack.c.l.b16 %v563
      %v656 = vunpack.c.l.b16 %v564
      %v657 = vpack.c.b16 %v656, %v655
      %v659 = vsel %vm321, %v609, 0
      %v662 = vsel %vm321, %v617, 0
      %v665 = vsel %vm321, %v625, 0
      %v668 = vsel %vm321, %v633, 0
      %v671 = vsel %vm321, %v641, 0
      %v674 = vsel %vm321, %v649, 0
      %v677 = vsel %vm321, %v652, 0
      %v680 = vsel %vm343, %v657, 0
      %682 = vmatprep.subr.bf16.mxu0 0
      %683 = vmatpush1.bf16.msra.mxu0 0
      %684 = vmatprep.subr.bf16.mxu0 0
      %685 = vmatpush1.bf16.msra.mxu0 0
      %686 = vmatprep.subr.bf16.mxu0 0
      %687 = vmatpush1.bf16.msra.mxu0 0
      %688 = vmatprep.subr.bf16.mxu0 0
      %689 = vmatpush1.bf16.msra.mxu0 0
      %690 = vmatprep.subr.bf16.mxu0 0
      %691 = vmatpush1.bf16.msra.mxu0 0
      %692 = vmatprep.subr.bf16.mxu0 0
      %693 = vmatpush1.bf16.msra.mxu0 0
      %694 = vmatprep.subr.bf16.mxu0 0
      %695 = vmatpush1.bf16.msra.mxu0 0
      %696 = vmatprep.subr.bf16.mxu0 0
      %697 = vmatpush1.bf16.msra.mxu0 %v680
      %698 = vmatprep.subr.bf16.mxu0 0
      %699 = vmatpush2.bf16.msra.mxu0 0
      %700 = vmatprep.subr.bf16.mxu0 0
      %701 = vmatpush2.bf16.msra.mxu0 0
      %702 = vmatprep.subr.bf16.mxu0 0
      %703 = vmatpush2.bf16.msra.mxu0 0
      %704 = vmatprep.subr.bf16.mxu0 0
      %705 = vmatpush2.bf16.msra.mxu0 0
      %706 = vmatprep.subr.bf16.mxu0 0
      %707 = vmatpush2.bf16.msra.mxu0 0
      %708 = vmatprep.subr.bf16.mxu0 0
      %709 = vmatpush2.bf16.msra.mxu0 0
      %710 = vmatprep.subr.bf16.mxu0 0
      %711 = vmatpush2.bf16.msra.mxu0 0
      %712 = vmatprep.subr.bf16.mxu0 0
      %713 = vmatpush2.bf16.msra.mxu0 0
      %714 = vmatprep.mubr.bf16.mxu0 0
      %715 = vmatmul.mubr.bf16.gmra.mxu0 %v659
      %v716 = vpop.f32.mrf.mxu0
      %v717 = vadd.f32 0.0, %v716
      %v718 = vpop.f32.mrf.mxu0
      %v719 = vpop.f32.mrf.mxu0
      %v720 = vadd.f32 0.0, %v719
      %v721 = vpop.f32.mrf.mxu0
      %722 = vmatprep.mubr.bf16.mxu0 0
      %723 = vmatmul.mubr.bf16.gmra.mxu0 %v662
      %v724 = vpop.f32.mrf.mxu0
      %v725 = vadd.f32 0.0, %v724
      %v726 = vpop.f32.mrf.mxu0
      %v727 = vpop.f32.mrf.mxu0
      %v728 = vadd.f32 0.0, %v727
      %v729 = vpop.f32.mrf.mxu0
      %730 = vmatprep.mubr.bf16.mxu0 0
      %731 = vmatmul.mubr.bf16.gmra.mxu0 %v665
      %v732 = vpop.f32.mrf.mxu0
      %v733 = vadd.f32 0.0, %v732
      %v734 = vpop.f32.mrf.mxu0
      %v735 = vpop.f32.mrf.mxu0
      %v736 = vadd.f32 0.0, %v735
      %v737 = vpop.f32.mrf.mxu0
      %738 = vmatprep.mubr.bf16.mxu0 0
      %739 = vmatmul.mubr.bf16.gmra.mxu0 %v668
      %v740 = vpop.f32.mrf.mxu0
      %v741 = vadd.f32 0.0, %v740
      %v742 = vpop.f32.mrf.mxu0
      %v743 = vpop.f32.mrf.mxu0
      %v744 = vadd.f32 0.0, %v743
      %v745 = vpop.f32.mrf.mxu0
      %746 = vmatprep.mubr.bf16.mxu0 0
      %747 = vmatmul.mubr.bf16.gmra.mxu0 %v671
      %v748 = vpop.f32.mrf.mxu0
      %v749 = vadd.f32 0.0, %v748
      %v750 = vpop.f32.mrf.mxu0
      %v751 = vpop.f32.mrf.mxu0
      %v752 = vadd.f32 0.0, %v751
      %v753 = vpop.f32.mrf.mxu0
      %754 = vmatprep.mubr.bf16.mxu0 0
      %755 = vmatmul.mubr.bf16.gmra.mxu0 %v674
      %v756 = vpop.f32.mrf.mxu0
      %v757 = vadd.f32 0.0, %v756
      %v758 = vpop.f32.mrf.mxu0
      %v759 = vpop.f32.mrf.mxu0
      %v760 = vadd.f32 0.0, %v759
      %v761 = vpop.f32.mrf.mxu0
      %762 = vmatprep.mubr.bf16.mxu0 0
      %763 = vmatmul.mubr.bf16.gmra.mxu0 %v677
      %v764 = vpop.f32.mrf.mxu0
      %v765 = vadd.f32 0.0, %v764
      %v766 = vpop.f32.mrf.mxu0
      %v767 = vpop.f32.mrf.mxu0
      %v768 = vpop.f32.mrf.mxu0
      %769 = vdwg.mxu0
      %v770 = vadd.f32 %v496, %v717
      %v771 = vadd.f32 %v499, %v720
      %v772 = vadd.f32 %v504, %v725
      %v773 = vadd.f32 %v507, %v728
      %v774 = vadd.f32 %v512, %v733
      %v775 = vadd.f32 %v515, %v736
      %v776 = vadd.f32 %v520, %v741
      %v777 = vadd.f32 %v523, %v744
      %v778 = vadd.f32 %v528, %v749
      %v779 = vadd.f32 %v531, %v752
      %v780 = vadd.f32 %v536, %v757
      %v781 = vadd.f32 %v539, %v760
      %v782 = vadd.f32 %v544, %v765
      %v783 = vld [vmem:[%s197 + $0x8] sm:$0xe]
      %s784 = scalar_lea.vmem %s1, 24
      %v785 = vld [vmem:[%s784] sm:$0xf]
      %v786 = vld [vmem:[%s784 + $0x4] sm:$0x3]
      %v788 = vunpack.c.l.b16 %v783
      %v789 = vpack.c.b16 %v579, %v788
      %vm790 = vcmask 1046528
      %v791 = vrot.slane %v789, 1
      %v792 = vrot.slane %v592, 1
      %v793 = vsel %vm790, %v791, %v792
      %v794 = vrot.slane %v593, 1
      %v795 = vsel %vm790, %v792, %v794
      %v796 = vrot.slane %v594, 1
      %v797 = vsel %vm790, %v794, %v796
      %v798 = vrot.slane %v595, 1
      %v799 = vsel %vm790, %v796, %v798
      %v800 = vrot.slane %v596, 1
      %v801 = vsel %vm790, %v798, %v800
      %v802 = vrot.slane %v597, 1
      %v803 = vsel %vm790, %v800, %v802
      %v806 = vunpack.c.l.b16 %v785
      %v807 = vunpack.c.l.b16 %v786
      %v808 = vpack.c.b16 %v807, %v806
      %v810 = vsel %vm321, %v793, 0
      %v813 = vsel %vm321, %v795, 0
      %v816 = vsel %vm321, %v797, 0
      %v819 = vsel %vm321, %v799, 0
      %v822 = vsel %vm321, %v801, 0
      %v825 = vsel %vm321, %v803, 0
      %v828 = vsel %vm321, %v802, 0
      %v831 = vsel %vm343, %v808, 0
      %833 = vmatprep.subr.bf16.mxu0 0
      %834 = vmatpush1.bf16.msra.mxu0 0
      %835 = vmatprep.subr.bf16.mxu0 0
      %836 = vmatpush1.bf16.msra.mxu0 0
      %837 = vmatprep.subr.bf16.mxu0 0
      %838 = vmatpush1.bf16.msra.mxu0 0
      %839 = vmatprep.subr.bf16.mxu0 0
      %840 = vmatpush1.bf16.msra.mxu0 0
      %841 = vmatprep.subr.bf16.mxu0 0
      %842 = vmatpush1.bf16.msra.mxu0 0
      %843 = vmatprep.subr.bf16.mxu0 0
      %844 = vmatpush1.bf16.msra.mxu0 0
      %845 = vmatprep.subr.bf16.mxu0 0
      %846 = vmatpush1.bf16.msra.mxu0 0
      %847 = vmatprep.subr.bf16.mxu0 0
      %848 = vmatpush1.bf16.msra.mxu0 %v831
      %849 = vmatprep.subr.bf16.mxu0 0
      %850 = vmatpush2.bf16.msra.mxu0 0
      %851 = vmatprep.subr.bf16.mxu0 0
      %852 = vmatpush2.bf16.msra.mxu0 0
      %853 = vmatprep.subr.bf16.mxu0 0
      %854 = vmatpush2.bf16.msra.mxu0 0
      %855 = vmatprep.subr.bf16.mxu0 0
      %856 = vmatpush2.bf16.msra.mxu0 0
      %857 = vmatprep.subr.bf16.mxu0 0
      %858 = vmatpush2.bf16.msra.mxu0 0
      %859 = vmatprep.subr.bf16.mxu0 0
      %860 = vmatpush2.bf16.msra.mxu0 0
      %861 = vmatprep.subr.bf16.mxu0 0
      %862 = vmatpush2.bf16.msra.mxu0 0
      %863 = vmatprep.subr.bf16.mxu0 0
      %864 = vmatpush2.bf16.msra.mxu0 0
      %865 = vmatprep.mubr.bf16.mxu0 0
      %866 = vmatmul.mubr.bf16.gmra.mxu0 %v810
      %v867 = vpop.f32.mrf.mxu0
      %v868 = vadd.f32 0.0, %v867
      %v869 = vpop.f32.mrf.mxu0
      %v870 = vpop.f32.mrf.mxu0
      %v871 = vadd.f32 0.0, %v870
      %v872 = vpop.f32.mrf.mxu0
      %873 = vmatprep.mubr.bf16.mxu0 0
      %874 = vmatmul.mubr.bf16.gmra.mxu0 %v813
      %v875 = vpop.f32.mrf.mxu0
      %v876 = vadd.f32 0.0, %v875
      %v877 = vpop.f32.mrf.mxu0
      %v878 = vpop.f32.mrf.mxu0
      %v879 = vadd.f32 0.0, %v878
      %v880 = vpop.f32.mrf.mxu0
      %881 = vmatprep.mubr.bf16.mxu0 0
      %882 = vmatmul.mubr.bf16.gmra.mxu0 %v816
      %v883 = vpop.f32.mrf.mxu0
      %v884 = vadd.f32 0.0, %v883
      %v885 = vpop.f32.mrf.mxu0
      %v886 = vpop.f32.mrf.mxu0
      %v887 = vadd.f32 0.0, %v886
      %v888 = vpop.f32.mrf.mxu0
      %889 = vmatprep.mubr.bf16.mxu0 0
      %890 = vmatmul.mubr.bf16.gmra.mxu0 %v819
      %v891 = vpop.f32.mrf.mxu0
      %v892 = vadd.f32 0.0, %v891
      %v893 = vpop.f32.mrf.mxu0
      %v894 = vpop.f32.mrf.mxu0
      %v895 = vadd.f32 0.0, %v894
      %v896 = vpop.f32.mrf.mxu0
      %897 = vmatprep.mubr.bf16.mxu0 0
      %898 = vmatmul.mubr.bf16.gmra.mxu0 %v822
      %v899 = vpop.f32.mrf.mxu0
      %v900 = vadd.f32 0.0, %v899
      %v901 = vpop.f32.mrf.mxu0
      %v902 = vpop.f32.mrf.mxu0
      %v903 = vadd.f32 0.0, %v902
      %v904 = vpop.f32.mrf.mxu0
      %905 = vmatprep.mubr.bf16.mxu0 0
      %906 = vmatmul.mubr.bf16.gmra.mxu0 %v825
      %v907 = vpop.f32.mrf.mxu0
      %v908 = vadd.f32 0.0, %v907
      %v909 = vpop.f32.mrf.mxu0
      %v910 = vpop.f32.mrf.mxu0
      %v911 = vadd.f32 0.0, %v910
      %v912 = vpop.f32.mrf.mxu0
      %913 = vmatprep.mubr.bf16.mxu0 0
      %914 = vmatmul.mubr.bf16.gmra.mxu0 %v828
      %v915 = vpop.f32.mrf.mxu0
      %v916 = vadd.f32 0.0, %v915
      %v917 = vpop.f32.mrf.mxu0
      %v918 = vpop.f32.mrf.mxu0
      %v919 = vpop.f32.mrf.mxu0
      %920 = vdwg.mxu0
      %v921 = vadd.f32 %v770, %v868
      %v922 = vadd.f32 %v771, %v871
      %v923 = vadd.f32 %v772, %v876
      %v924 = vadd.f32 %v773, %v879
      %v925 = vadd.f32 %v774, %v884
      %v926 = vadd.f32 %v775, %v887
      %v927 = vadd.f32 %v776, %v892
      %v928 = vadd.f32 %v777, %v895
      %v929 = vadd.f32 %v778, %v900
      %v930 = vadd.f32 %v779, %v903
      %v931 = vadd.f32 %v780, %v908
      %v932 = vadd.f32 %v781, %v911
      %v933 = vadd.f32 %v782, %v916
      %v934 = vld [vmem:[%s2] sm:$0x1]
      %v936 = vlaneseq
      %v937 = vshrl.u32 %v936, 7
      %v938 = vsub.s32 0, %v937
      %v939 = vrot.slane %v934, %v938
      %v941 = vadd.f32 %v921, %v939
      %v942 = vadd.f32 %v922, %v939
      %v943 = vadd.f32 %v923, %v939
      %v944 = vadd.f32 %v924, %v939
      %v945 = vadd.f32 %v925, %v939
      %v946 = vadd.f32 %v926, %v939
      %v947 = vadd.f32 %v927, %v939
      %v948 = vadd.f32 %v928, %v939
      %v949 = vadd.f32 %v929, %v939
      %v950 = vadd.f32 %v930, %v939
      %v951 = vadd.f32 %v931, %v939
      %v952 = vadd.f32 %v932, %v939
      %v953 = vadd.f32 %v933, %v939
      %v954 = vmul.f32 %v941, 0.5
      %v955 = vmul.f32 %v942, 0.5
      %v956 = vmul.f32 %v943, 0.5
      %v957 = vmul.f32 %v944, 0.5
      %v958 = vmul.f32 %v945, 0.5
      %v959 = vmul.f32 %v946, 0.5
      %v960 = vmul.f32 %v947, 0.5
      %v961 = vmul.f32 %v948, 0.5
      %v962 = vmul.f32 %v949, 0.5
      %v963 = vmul.f32 %v950, 0.5
      %v964 = vmul.f32 %v951, 0.5
      %v965 = vmul.f32 %v952, 0.5
      %v966 = vmul.f32 %v953, 0.5
      %v967 = vmul.f32 %v941, 0.044715
      %v968 = vmul.f32 %v942, 0.044715
      %v969 = vmul.f32 %v943, 0.044715
      %v970 = vmul.f32 %v944, 0.044715
      %v971 = vmul.f32 %v945, 0.044715
      %v972 = vmul.f32 %v946, 0.044715
      %v973 = vmul.f32 %v947, 0.044715
      %v974 = vmul.f32 %v948, 0.044715
      %v975 = vmul.f32 %v949, 0.044715
      %v976 = vmul.f32 %v950, 0.044715
      %v977 = vmul.f32 %v951, 0.044715
      %v978 = vmul.f32 %v952, 0.044715
      %v979 = vmul.f32 %v953, 0.044715
      %v980 = vmul.f32 %v967, %v941
      %v981 = vmul.f32 %v968, %v942
      %v982 = vmul.f32 %v969, %v943
      %v983 = vmul.f32 %v970, %v944
      %v984 = vmul.f32 %v971, %v945
      %v985 = vmul.f32 %v972, %v946
      %v986 = vmul.f32 %v973, %v947
      %v987 = vmul.f32 %v974, %v948
      %v988 = vmul.f32 %v975, %v949
      %v989 = vmul.f32 %v976, %v950
      %v990 = vmul.f32 %v977, %v951
      %v991 = vmul.f32 %v978, %v952
      %v992 = vmul.f32 %v979, %v953
      %v993 = vmul.f32 %v980, %v941
      %v994 = vmul.f32 %v981, %v942
      %v995 = vmul.f32 %v982, %v943
      %v996 = vmul.f32 %v983, %v944
      %v997 = vmul.f32 %v984, %v945
      %v998 = vmul.f32 %v985, %v946
      %v999 = vmul.f32 %v986, %v947
      %v1000 = vmul.f32 %v987, %v948
      %v1001 = vmul.f32 %v988, %v949
      %v1002 = vmul.f32 %v989, %v950
      %v1003 = vmul.f32 %v990, %v951
      %v1004 = vmul.f32 %v991, %v952
      %v1005 = vmul.f32 %v992, %v953
      %v1006 = vadd.f32 %v941, %v993
      %v1007 = vadd.f32 %v942, %v994
      %v1008 = vadd.f32 %v943, %v995
      %v1009 = vadd.f32 %v944, %v996
      %v1010 = vadd.f32 %v945, %v997
      %v1011 = vadd.f32 %v946, %v998
      %v1012 = vadd.f32 %v947, %v999
      %v1013 = vadd.f32 %v948, %v1000
      %v1014 = vadd.f32 %v949, %v1001
      %v1015 = vadd.f32 %v950, %v1002
      %v1016 = vadd.f32 %v951, %v1003
      %v1017 = vadd.f32 %v952, %v1004
      %v1018 = vadd.f32 %v953, %v1005
      %v1019 = vmul.f32 %v1006, 0.7978846
      %v1020 = vmul.f32 %v1007, 0.7978846
      %v1021 = vmul.f32 %v1008, 0.7978846
      %v1022 = vmul.f32 %v1009, 0.7978846
      %v1023 = vmul.f32 %v1010, 0.7978846
      %v1024 = vmul.f32 %v1011, 0.7978846
      %v1025 = vmul.f32 %v1012, 0.7978846
      %v1026 = vmul.f32 %v1013, 0.7978846
      %v1027 = vmul.f32 %v1014, 0.7978846
      %v1028 = vmul.f32 %v1015, 0.7978846
      %v1029 = vmul.f32 %v1016, 0.7978846
      %v1030 = vmul.f32 %v1017, 0.7978846
      %v1031 = vmul.f32 %v1018, 0.7978846
      %v1032 = vtanh.pop %v1019
      %v1033 = vtanh.pop %v1020
      %v1034 = vtanh.pop %v1021
      %v1035 = vtanh.pop %v1022
      %v1036 = vtanh.pop %v1023
      %v1037 = vtanh.pop %v1024
      %v1038 = vtanh.pop %v1025
      %v1039 = vtanh.pop %v1026
      %v1040 = vtanh.pop %v1027
      %v1041 = vtanh.pop %v1028
      %v1042 = vtanh.pop %v1029
      %v1043 = vtanh.pop %v1030
      %v1044 = vtanh.pop %v1031
      %v1045 = vadd.f32 %v1032, 1.0
      %v1046 = vadd.f32 %v1033, 1.0
      %v1047 = vadd.f32 %v1034, 1.0
      %v1048 = vadd.f32 %v1035, 1.0
      %v1049 = vadd.f32 %v1036, 1.0
      %v1050 = vadd.f32 %v1037, 1.0
      %v1051 = vadd.f32 %v1038, 1.0
      %v1052 = vadd.f32 %v1039, 1.0
      %v1053 = vadd.f32 %v1040, 1.0
      %v1054 = vadd.f32 %v1041, 1.0
      %v1055 = vadd.f32 %v1042, 1.0
      %v1056 = vadd.f32 %v1043, 1.0
      %v1057 = vadd.f32 %v1044, 1.0
      %v1058 = vmul.f32 %v954, %v1045
      %v1059 = vmul.f32 %v955, %v1046
      %v1060 = vmul.f32 %v956, %v1047
      %v1061 = vmul.f32 %v957, %v1048
      %v1062 = vmul.f32 %v958, %v1049
      %v1063 = vmul.f32 %v959, %v1050
      %v1064 = vmul.f32 %v960, %v1051
      %v1065 = vmul.f32 %v961, %v1052
      %v1066 = vmul.f32 %v962, %v1053
      %v1067 = vmul.f32 %v963, %v1054
      %v1068 = vmul.f32 %v964, %v1055
      %v1069 = vmul.f32 %v965, %v1056
      %v1070 = vmul.f32 %v966, %v1057
      %v1071 = vpack.c.bf16 %v1059, %v1058
      %v1072 = vpack.c.bf16 %v1061, %v1060
      %v1073 = vpack.c.bf16 %v1063, %v1062
      %v1074 = vpack.c.bf16 %v1065, %v1064
      %v1075 = vpack.c.bf16 %v1067, %v1066
      %v1076 = vpack.c.bf16 %v1069, %v1068
      %v1077 = vpack.c.bf16 %v1070, %v1070
      %v1085 = vunpack.c.l.b16 %v1071
      %v1086 = vunpack.c.h.b16 %v1071
      %v1087 = vunpack.c.l.b16 %v1072
      %v1088 = vunpack.c.h.b16 %v1072
      %v1089 = vunpack.c.l.b16 %v1073
      %v1090 = vunpack.c.h.b16 %v1073
      %v1091 = vunpack.c.l.b16 %v1074
      %v1092 = vunpack.c.h.b16 %v1074
      %v1093 = vunpack.c.l.b16 %v1075
      %v1094 = vunpack.c.h.b16 %v1075
      %v1095 = vunpack.c.l.b16 %v1076
      %v1096 = vunpack.c.h.b16 %v1076
      %v1097 = vunpack.c.l.b16 %v1077
      %v1098 = vpack.c.b16 %v1085, %v1085
      %v1099 = vpack.c.b16 %v1086, %v1086
      %v1100 = vpack.c.b16 %v1087, %v1087
      %v1101 = vpack.c.b16 %v1088, %v1088
      %v1102 = vpack.c.b16 %v1089, %v1089
      %v1103 = vpack.c.b16 %v1090, %v1090
      %v1104 = vpack.c.b16 %v1091, %v1091
      %v1105 = vpack.c.b16 %v1092, %v1092
      %v1106 = vpack.c.b16 %v1093, %v1093
      %v1107 = vpack.c.b16 %v1094, %v1094
      %v1108 = vpack.c.b16 %v1095, %v1095
      %v1109 = vpack.c.b16 %v1096, %v1096
      %v1110 = vpack.c.b16 %v1097, %v1097
      %1124 = vst [vmem:[%s206] sm:$0xf] %v1098
      %1125 = vst [vmem:[%s206 + $0x4] sm:$0xf] %v1099
      %1126 = vst [vmem:[%s206 + $0x8] sm:$0xf] %v1100
      %1127 = vst [vmem:[%s206 + $0xc] sm:$0xf] %v1101
      %1128 = vst [vmem:[%s206 + $0x10] sm:$0xf] %v1102
      %1129 = vst [vmem:[%s206 + $0x14] sm:$0xf] %v1103
      %1130 = vst [vmem:[%s206 + $0x18] sm:$0xf] %v1104
      %1131 = vst [vmem:[%s206 + $0x1c] sm:$0xf] %v1105
      %1132 = vst [vmem:[%s206 + $0x20] sm:$0xf] %v1106
      %1133 = vst [vmem:[%s206 + $0x24] sm:$0xf] %v1107
      %1134 = vst [vmem:[%s206 + $0x28] sm:$0xf] %v1108
      %1135 = vst [vmem:[%s206 + $0x2c] sm:$0xf] %v1109
      %1136 = vst [vmem:[%s206 + $0x30] sm:$0x7] %v1110
      %p1137 = scmp.lt.s32.totalorder %s18, 1
      %s1138 = scalar_select %p1137, %s18, 1
      %p1139 = scmp.lt.s32.totalorder %s19, 2
      %s1140 = scalar_select %p1139, %s19, 2
      %s1141 = smul.addr %s1140, 13
      %s1142 = smul.addr %s1138, 39
      %s1143 = sadd.s32 %s1141, %s1142
      %s1144 = smul.addr %s1143, 4
      %s1145 = scalar_lea.vmem %s3, %s1144
      // Predicated region
      $region33: #{tpu_custom_call.1} parent=31 // pred_check
        %p1146 = pneg %p116
      $region34: #{tpu_custom_call.1} parent=31 // pred_check_branch
        %1148 = sbr.rel (%p1146) target = $region36
      $region35: #{tpu_custom_call.1} parent=31 // pred_region
        _
      $region36: #{tpu_custom_call.1} parent=31 // pred_fallthru
        _
    $region32: #{tpu_custom_call.1} parent=5 // pred_fallthru
      _
    %p1149 = scmp.le.s32.totalorder 2, %s9
    // Predicated region
    $region37: #{tpu_custom_call.1} parent=5 // pred_check
      %p1150 = pneg %p1149
    $region38: #{tpu_custom_call.1} parent=5 // pred_check_branch
      %1152 = sbr.rel (%p1150) target = $region40
    $region39: #{tpu_custom_call.1} parent=5 // pred_region
      %s1153 = ssub.s32 %s9, 2
      // Predicated region
      $region41: #{tpu_custom_call.1} parent=39 // pred_check
        %p1154 = pneg %p122
      $region42: #{tpu_custom_call.1} parent=39 // pred_check_branch
        %1156 = sbr.rel (%p1154) target = $region44
      $region43: #{tpu_custom_call.1} parent=39 // pred_region
        %p1157 = scmp.lt.s32.totalorder %s20, 1
        %s1158 = scalar_select %p1157, %s20, 1
        %p1159 = scmp.lt.s32.totalorder %s21, 2
        %s1160 = scalar_select %p1159, %s21, 2
        %s1161 = smul.addr %s1160, 13
        %s1162 = smul.addr %s1158, 39
        %s1163 = sadd.s32 %s1161, %s1162
        %s1164 = smul.addr %s1163, 4
        %s1165 = scalar_lea.vmem %s3, %s1164
      $region44: #{tpu_custom_call.1} parent=39 // pred_fallthru
        _
    $region40: #{tpu_custom_call.1} parent=5 // pred_fallthru
      _
  $region6: #{tpu_custom_call.1} parent=0 // loop_footer
    %s13 = sadd.s32 1, %s9
  $region7: #{tpu_custom_call.1} parent=0 // loop_footer_branch
    %8 = sbr.rel target = $region3
  $region8: #{tpu_custom_call.1} parent=0 // loop_exit
    _

// kernel: tpu_custom_call.1
$region0: #{tpu_custom_call.1}
  #allocation0 [shape = 'u32[]', space=smem, size = 0x4, offset = 0x4, fixed_abs, tag = 'smem constant byte address 0x4 - core index']
  #allocation1 [shape = 'u32[144,128]{1,0:T(1,128)}', space=vmem, size = 0x12000, scoped, tag = 'internal scratch']
  %s0 = inlined_call_operand.vmem [shape: bf16[2,3,127,12], index: 0, kind: input, shape index: {}]
  %s1 = inlined_call_operand.vmem [shape: bf16[4,12,128], index: 1, kind: input, shape index: {}]
  %s2 = inlined_call_operand.vmem [shape: f32[1,128], index: 2, kind: input, shape index: {}]
  %s3 = inlined_call_operand.vmem [shape: bf16[2,3,102,128], index: 3, kind: output, shape index: {}]
  %s4 = sld [smem:[#allocation0]]
  $region45: #{tpu_custom_call.1} parent=0
    _
  %s6 = ssub.s32 1, %s4
  %s7 = scalar_select 0, %s6, %s4
  loop: start=0, step=1, limit=8
  $region2: #{tpu_custom_call.1} parent=0 // loop_pre_header
    _
  $region3: #{tpu_custom_call.1} parent=0 // loop_header
    %s9 = sphi 0, %s13
    %p10 = scmp.ge.s32.totalorder %s9, 8
    %s16 = sphi 0, %s28
    %s17 = sphi 0, %s24
    %s18 = sphi 0, %s16
    %s19 = sphi 0, %s17
    %s20 = sphi 0, %s18
    %s21 = sphi 0, %s19
    %s33 = sphi 0, %s35
    %s36 = sphi 0, %s33
    %s37 = sphi 0, %s36
    %s53 = sphi 0, %s37
    %s57 = sphi 0, %s57
    %s59 = sphi 0, %s57
    %s60 = sphi 0, %s59
    %s74 = sphi 0, %s60
    %s78 = sphi 0, %s78
    %s80 = sphi 0, %s78
    %s81 = sphi 0, %s80
    %s95 = sphi 0, %s81
    %s103 = sphi 0, %s105
    %s106 = sphi 0, %s103
    %s107 = sphi 0, %s106
    %s123 = sphi 0, %s107
  $region4: #{tpu_custom_call.1} parent=0 // loop_header_branch
    %12 = sbr.rel (%p10) target = $region8
  $region5: #{tpu_custom_call.1} parent=0 // loop_body
    %s14 = ssub.s32 %s9, 1
    %s15 = ssub.s32 %s9, 2
    %s22 = sadd.s32 1, %s17
    %p23 = scmp.ge.s32.totalorder %s22, 3
    %s24 = scalar_select %p23, 0, %s22
    %s25 = sadd.s32 1, %s16
    %s26 = scalar_select %p23, %s25, %s16
    %p27 = scmp.ge.s32.totalorder %s26, 2
    %s28 = scalar_select %p27, 0, %s26
    %s29 = ssub.s32 %s16, %s28
    %s30 = ssub.s32 %s17, %s24
    %s31 = sor.u32 %s29, %s30
    %p32 = scmp.eq.s32.totalorder %s31, 0
    %s34 = sadd.s32 %s33, 1
    %s35 = scalar_select %p32, %s33, %s34
    %p38 = pneg %p32
    %p39 = scmp.eq.s32.totalorder %s9, 5
    %p40 = por %p38, %p39
    %p41 = scmp.ne.s32.totalorder %s33, %s36
    %p42 = scmp.eq.s32.totalorder %s9, 0
    %p43 = por %p41, %p42
    %p44 = scmp.ne.s32.totalorder %s33, %s36
    %p45 = scmp.eq.s32.totalorder %s14, 5
    %p46 = por %p44, %p45
    %p47 = scmp.ne.s32.totalorder %s36, %s37
    %p48 = scmp.eq.s32.totalorder %s14, 0
    %p49 = por %p47, %p48
    %p50 = scmp.ne.s32.totalorder %s36, %s37
    %p51 = scmp.eq.s32.totalorder %s15, 5
    %p52 = por %p50, %p51
    %p54 = scmp.ne.s32.totalorder %s37, %s53
    %p55 = scmp.eq.s32.totalorder %s15, 0
    %p56 = por %p54, %p55
    %s58 = sadd.s32 %s57, 1
    %p61 = scmp.eq.s32.totalorder %s9, 5
    %p62 = scmp.ne.s32.totalorder %s57, %s59
    %p63 = scmp.eq.s32.totalorder %s9, 0
    %p64 = por %p62, %p63
    %p65 = scmp.ne.s32.totalorder %s57, %s59
    %p66 = scmp.eq.s32.totalorder %s14, 5
    %p67 = por %p65, %p66
    %p68 = scmp.ne.s32.totalorder %s59, %s60
    %p69 = scmp.eq.s32.totalorder %s14, 0
    %p70 = por %p68, %p69
    %p71 = scmp.ne.s32.totalorder %s59, %s60
    %p72 = scmp.eq.s32.totalorder %s15, 5
    %p73 = por %p71, %p72
    %p75 = scmp.ne.s32.totalorder %s60, %s74
    %p76 = scmp.eq.s32.totalorder %s15, 0
    %p77 = por %p75, %p76
    %s79 = sadd.s32 %s78, 1
    %p82 = scmp.eq.s32.totalorder %s9, 5
    %p83 = scmp.ne.s32.totalorder %s78, %s80
    %p84 = scmp.eq.s32.totalorder %s9, 0
    %p85 = por %p83, %p84
    %p86 = scmp.ne.s32.totalorder %s78, %s80
    %p87 = scmp.eq.s32.totalorder %s14, 5
    %p88 = por %p86, %p87
    %p89 = scmp.ne.s32.totalorder %s80, %s81
    %p90 = scmp.eq.s32.totalorder %s14, 0
    %p91 = por %p89, %p90
    %p92 = scmp.ne.s32.totalorder %s80, %s81
    %p93 = scmp.eq.s32.totalorder %s15, 5
    %p94 = por %p92, %p93
    %p96 = scmp.ne.s32.totalorder %s81, %s95
    %p97 = scmp.eq.s32.totalorder %s15, 0
    %p98 = por %p96, %p97
    %s99 = ssub.s32 %s16, %s28
    %s100 = ssub.s32 %s17, %s24
    %s101 = sor.u32 %s99, %s100
    %p102 = scmp.eq.s32.totalorder %s101, 0
    %s104 = sadd.s32 %s103, 1
    %s105 = scalar_select %p102, %s103, %s104
    %p108 = pneg %p102
    %p109 = scmp.eq.s32.totalorder %s9, 5
    %p110 = por %p108, %p109
    %p111 = scmp.ne.s32.totalorder %s103, %s106
    %p112 = scmp.eq.s32.totalorder %s9, 0
    %p113 = por %p111, %p112
    %p114 = scmp.ne.s32.totalorder %s103, %s106
    %p115 = scmp.eq.s32.totalorder %s14, 5
    %p116 = por %p114, %p115
    %p117 = scmp.ne.s32.totalorder %s106, %s107
    %p118 = scmp.eq.s32.totalorder %s14, 0
    %p119 = por %p117, %p118
    %p120 = scmp.ne.s32.totalorder %s106, %s107
    %p121 = scmp.eq.s32.totalorder %s15, 5
    %p122 = por %p120, %p121
    %p124 = scmp.ne.s32.totalorder %s107, %s123
    %p125 = scmp.eq.s32.totalorder %s15, 0
    %p126 = por %p124, %p125
    %p127 = scmp.le.s32.totalorder 1, %s9
    %p128 = scmp.lt.s32.totalorder %s9, 7
    %p129 = pnand %p127, %p128
    %p130 = pneg %p129
    // Predicated region
    $region9: #{tpu_custom_call.1} parent=5 // pred_check
      _
    $region10: #{tpu_custom_call.1} parent=5 // pred_check_branch
      %132 = sbr.rel (%p129) target = $region12
    $region11: #{tpu_custom_call.1} parent=5 // pred_region
      %s133 = ssub.s32 %s9, 1
      // Predicated region
      $region13: #{tpu_custom_call.1} parent=11 // pred_check
        %p134 = pneg %p70
      $region14: #{tpu_custom_call.1} parent=11 // pred_check_branch
        %136 = sbr.rel (%p134) target = $region16
      $region15: #{tpu_custom_call.1} parent=11 // pred_region
        _
      $region16: #{tpu_custom_call.1} parent=11 // pred_fallthru
        _
      // Predicated region
      $region17: #{tpu_custom_call.1} parent=11 // pred_check
        %p137 = pneg %p91
      $region18: #{tpu_custom_call.1} parent=11 // pred_check_branch
        %139 = sbr.rel (%p137) target = $region20
      $region19: #{tpu_custom_call.1} parent=11 // pred_region
        _
      $region20: #{tpu_custom_call.1} parent=11 // pred_fallthru
        _
    $region12: #{tpu_custom_call.1} parent=5 // pred_fallthru
      _
    %p140 = scmp.lt.s32.totalorder %s9, 6
    // Predicated region
    $region21: #{tpu_custom_call.1} parent=5 // pred_check
      %p141 = pneg %p140
    $region22: #{tpu_custom_call.1} parent=5 // pred_check_branch
      %143 = sbr.rel (%p141) target = $region24
    $region23: #{tpu_custom_call.1} parent=5 // pred_region
      // Predicated region
      $region25: #{tpu_custom_call.1} parent=23 // pred_check
        %p144 = pneg %p43
      $region26: #{tpu_custom_call.1} parent=23 // pred_check_branch
        %146 = sbr.rel (%p144) target = $region28
      $region27: #{tpu_custom_call.1} parent=23 // pred_region
        %p147 = scmp.lt.s32.totalorder %s16, 1
        %s148 = scalar_select %p147, %s16, 1
        %p149 = scmp.lt.s32.totalorder %s17, 2
        %s150 = scalar_select %p149, %s17, 2
        %s151 = smul.addr %s150, 16
        %s152 = smul.addr %s148, 48
        %s153 = sadd.s32 %s151, %s152
        %s154 = smul.addr %s153, 4
        %s155 = scalar_lea.vmem %s0, %s154
      $region28: #{tpu_custom_call.1} parent=23 // pred_fallthru
        _
    $region24: #{tpu_custom_call.1} parent=5 // pred_fallthru
      _
    %p156 = scmp.le.s32.totalorder 1, %s9
    %p157 = scmp.lt.s32.totalorder %s9, 7
    %p158 = pnand %p156, %p157
    %p159 = pneg %p158
    // Predicated region
    $region29: #{tpu_custom_call.1} parent=5 // pred_check
      _
    $region30: #{tpu_custom_call.1} parent=5 // pred_check_branch
      %161 = sbr.rel (%p158) target = $region32
    $region31: #{tpu_custom_call.1} parent=5 // pred_region
      %s162 = ssub.s32 %s9, 1
      %p163 = scmp.lt.s32.totalorder %s18, 1
      %s164 = scalar_select %p163, %s18, 1
      %p165 = scmp.lt.s32.totalorder %s19, 2
      %s166 = scalar_select %p165, %s19, 2
      %s167 = smul.addr %s166, 16
      %s168 = smul.addr %s164, 48
      %s169 = sadd.s32 %s167, %s168
      %s170 = smul.addr %s169, 4
      %s171 = scalar_lea.vmem %s0, %s170
      %p172 = pneg %p49
      %p173 = pneg %p46
      %p174 = pneg %p70
      %p175 = pneg %p67
      %p176 = pneg %p91
      %p177 = pneg %p88
      %p178 = pneg %p119
      %p179 = pneg %p116
      %p180 = scmp.lt.s32.totalorder %s18, 1
      %s181 = scalar_select %p180, %s18, 1
      %p182 = scmp.lt.s32.totalorder %s19, 2
      %s183 = scalar_select %p182, %s19, 2
      %s184 = smul.addr %s183, 13
      %s185 = smul.addr %s181, 39
      %s186 = sadd.s32 %s184, %s185
      %s187 = smul.addr %s186, 4
      %s188 = scalar_lea.vmem %s3, %s187
      %p189 = scmp.lt.s32.totalorder %s18, 1
      %s190 = scalar_select %p189, %s18, 1
      %p191 = scmp.lt.s32.totalorder %s19, 2
      %s192 = scalar_select %p191, %s19, 2
      %s193 = smul.addr %s192, 16
      %s194 = smul.addr %s190, 48
      %s195 = sadd.s32 %s193, %s194
      %s196 = smul.addr %s195, 4
      %s197 = scalar_lea.vmem %s0, %s196
      %p198 = scmp.lt.s32.totalorder %s18, 1
      %s199 = scalar_select %p198, %s18, 1
      %p200 = scmp.lt.s32.totalorder %s19, 2
      %s201 = scalar_select %p200, %s19, 2
      %s202 = smul.addr %s201, 13
      %s203 = smul.addr %s199, 39
      %s204 = sadd.s32 %s202, %s203
      %s205 = smul.addr %s204, 4
      %s206 = scalar_lea.vmem %s3, %s205
      %v208 = vld [vmem:[%s197] sm:$0xf]
      %v209 = vld [vmem:[%s197 + $0x4] sm:$0xf]
      %v210 = vld [vmem:[%s197 + $0x8] sm:$0xf]
      %v211 = vld [vmem:[%s197 + $0xc] sm:$0xf]
      %v212 = vld [vmem:[%s197 + $0x10] sm:$0xf]
      %v213 = vld [vmem:[%s197 + $0x14] sm:$0xf]
      %v214 = vld [vmem:[%s197 + $0x18] sm:$0xf]
      %v215 = vld [vmem:[%s197 + $0x1c] sm:$0xf]
      %v216 = vld [vmem:[%s197 + $0x20] sm:$0xf]
      %v217 = vld [vmem:[%s197 + $0x24] sm:$0xf]
      %v218 = vld [vmem:[%s197 + $0x28] sm:$0xf]
      %v219 = vld [vmem:[%s197 + $0x2c] sm:$0xf]
      %v220 = vld [vmem:[%s197 + $0x30] sm:$0x7]
      %v221 = vld [vmem:[%s1] sm:$0xf]
      %v222 = vld [vmem:[%s1 + $0x4] sm:$0x3]
      %v223 = vld [vmem:[%s197 + $0x30] sm:$0xf]
      %s224 = scalar_lea.vmem %s1, 8
      %v225 = vld [vmem:[%s224] sm:$0xf]
      %v226 = vld [vmem:[%s224 + $0x4] sm:$0x3]
      %v240 = vunpack.c.l.b16 %v208
      %v241 = vunpack.c.l.b16 %v209
      %v242 = vunpack.c.l.b16 %v210
      %v243 = vunpack.c.l.b16 %v211
      %v244 = vunpack.c.l.b16 %v212
      %v245 = vunpack.c.l.b16 %v213
      %v246 = vunpack.c.l.b16 %v214
      %v247 = vunpack.c.l.b16 %v215
      %v248 = vunpack.c.l.b16 %v216
      %v249 = vunpack.c.l.b16 %v217
      %v250 = vunpack.c.l.b16 %v218
      %v251 = vunpack.c.l.b16 %v219
      %v252 = vunpack.c.l.b16 %v223
      %v253 = vpack.c.b16 %v241, %v240
      %v254 = vpack.c.b16 %v243, %v242
      %v255 = vpack.c.b16 %v245, %v244
      %v256 = vpack.c.b16 %v247, %v246
      %v257 = vpack.c.b16 %v249, %v248
      %v258 = vpack.c.b16 %v251, %v250
      %v259 = vpack.c.b16 %v252, %v252
      %vm260 = vsmask.f32 7424
      %v262 = vshrl.u32 %v253, 16
      %v264 = vshll.u32 %v253, 16
      %v266 = vrot.slane %v264, 1
      %v267 = vor.u32 %v262, %v266
      %v269 = vshll.u32 %v254, 16
      %v271 = vrot.slane %v269, 1
      %v272 = vsel %vm260, %v267, %v271
      %v273 = vshrl.u32 %v254, 16
      %v275 = vor.u32 %v273, %v271
      %v277 = vshll.u32 %v255, 16
      %v279 = vrot.slane %v277, 1
      %v280 = vsel %vm260, %v275, %v279
      %v281 = vshrl.u32 %v255, 16
      %v283 = vor.u32 %v281, %v279
      %v285 = vshll.u32 %v256, 16
      %v287 = vrot.slane %v285, 1
      %v288 = vsel %vm260, %v283, %v287
      %v289 = vshrl.u32 %v256, 16
      %v291 = vor.u32 %v289, %v287
      %v293 = vshll.u32 %v257, 16
      %v295 = vrot.slane %v293, 1
      %v296 = vsel %vm260, %v291, %v295
      %v297 = vshrl.u32 %v257, 16
      %v299 = vor.u32 %v297, %v295
      %v301 = vshll.u32 %v258, 16
      %v303 = vrot.slane %v301, 1
      %v304 = vsel %vm260, %v299, %v303
      %v305 = vshrl.u32 %v258, 16
      %v307 = vor.u32 %v305, %v303
      %v309 = vshll.u32 %v259, 16
      %v311 = vrot.slane %v309, 1
      %v312 = vsel %vm260, %v307, %v311
      %v313 = vshrl.u32 %v259, 16
      %v315 = vor.u32 %v313, %v311
      %v318 = vunpack.c.l.b16 %v225
      %v319 = vunpack.c.l.b16 %v226
      %v320 = vpack.c.b16 %v319, %v318
      %vm321 = vcmask 97280
      %v323 = vsel %vm321, %v272, 0
      %v326 = vsel %vm321, %v280, 0
      %v329 = vsel %vm321, %v288, 0
      %v332 = vsel %vm321, %v296, 0
      %v335 = vsel %vm321, %v304, 0
      %v338 = vsel %vm321, %v312, 0
      %v341 = vsel %vm321, %v315, 0
      %vm343 = vcmask 1045504
      %v345 = vsel %vm343, %v320, 0
      %347 = vmatprep.subr.bf16.mxu0 0
      %348 = vmatpush1.bf16.msra.mxu0 0
      %349 = vmatprep.subr.bf16.mxu0 0
      %350 = vmatpush1.bf16.msra.mxu0 0
      %351 = vmatprep.subr.bf16.mxu0 0
      %352 = vmatpush1.bf16.msra.mxu0 0
      %353 = vmatprep.subr.bf16.mxu0 0
      %354 = vmatpush1.bf16.msra.mxu0 0
      %355 = vmatprep.subr.bf16.mxu0 0
      %356 = vmatpush1.bf16.msra.mxu0 0
      %357 = vmatprep.subr.bf16.mxu0 0
      %358 = vmatpush1.bf16.msra.mxu0 0
      %359 = vmatprep.subr.bf16.mxu0 0
      %360 = vmatpush1.bf16.msra.mxu0 0
      %361 = vmatprep.subr.bf16.mxu0 0
      %362 = vmatpush1.bf16.msra.mxu0 %v345
      %363 = vmatprep.subr.bf16.mxu0 0
      %364 = vmatpush2.bf16.msra.mxu0 0
      %365 = vmatprep.subr.bf16.mxu0 0
      %366 = vmatpush2.bf16.msra.mxu0 0
      %367 = vmatprep.subr.bf16.mxu0 0
      %368 = vmatpush2.bf16.msra.mxu0 0
      %369 = vmatprep.subr.bf16.mxu0 0
      %370 = vmatpush2.bf16.msra.mxu0 0
      %371 = vmatprep.subr.bf16.mxu0 0
      %372 = vmatpush2.bf16.msra.mxu0 0
      %373 = vmatprep.subr.bf16.mxu0 0
      %374 = vmatpush2.bf16.msra.mxu0 0
      %375 = vmatprep.subr.bf16.mxu0 0
      %376 = vmatpush2.bf16.msra.mxu0 0
      %377 = vmatprep.subr.bf16.mxu0 0
      %378 = vmatpush2.bf16.msra.mxu0 0
      %379 = vmatprep.mubr.bf16.mxu0 0
      %380 = vmatmul.mubr.bf16.gmra.mxu0 %v323
      %v381 = vpop.f32.mrf.mxu0
      %v382 = vadd.f32 0.0, %v381
      %v383 = vpop.f32.mrf.mxu0
      %v384 = vpop.f32.mrf.mxu0
      %v385 = vadd.f32 0.0, %v384
      %v386 = vpop.f32.mrf.mxu0
      %387 = vmatprep.mubr.bf16.mxu0 0
      %388 = vmatmul.mubr.bf16.gmra.mxu0 %v326
      %v389 = vpop.f32.mrf.mxu0
      %v390 = vadd.f32 0.0, %v389
      %v391 = vpop.f32.mrf.mxu0
      %v392 = vpop.f32.mrf.mxu0
      %v393 = vadd.f32 0.0, %v392
      %v394 = vpop.f32.mrf.mxu0
      %395 = vmatprep.mubr.bf16.mxu0 0
      %396 = vmatmul.mubr.bf16.gmra.mxu0 %v329
      %v397 = vpop.f32.mrf.mxu0
      %v398 = vadd.f32 0.0, %v397
      %v399 = vpop.f32.mrf.mxu0
      %v400 = vpop.f32.mrf.mxu0
      %v401 = vadd.f32 0.0, %v400
      %v402 = vpop.f32.mrf.mxu0
      %403 = vmatprep.mubr.bf16.mxu0 0
      %404 = vmatmul.mubr.bf16.gmra.mxu0 %v332
      %v405 = vpop.f32.mrf.mxu0
      %v406 = vadd.f32 0.0, %v405
      %v407 = vpop.f32.mrf.mxu0
      %v408 = vpop.f32.mrf.mxu0
      %v409 = vadd.f32 0.0, %v408
      %v410 = vpop.f32.mrf.mxu0
      %411 = vmatprep.mubr.bf16.mxu0 0
      %412 = vmatmul.mubr.bf16.gmra.mxu0 %v335
      %v413 = vpop.f32.mrf.mxu0
      %v414 = vadd.f32 0.0, %v413
      %v415 = vpop.f32.mrf.mxu0
      %v416 = vpop.f32.mrf.mxu0
      %v417 = vadd.f32 0.0, %v416
      %v418 = vpop.f32.mrf.mxu0
      %419 = vmatprep.mubr.bf16.mxu0 0
      %420 = vmatmul.mubr.bf16.gmra.mxu0 %v338
      %v421 = vpop.f32.mrf.mxu0
      %v422 = vadd.f32 0.0, %v421
      %v423 = vpop.f32.mrf.mxu0
      %v424 = vpop.f32.mrf.mxu0
      %v425 = vadd.f32 0.0, %v424
      %v426 = vpop.f32.mrf.mxu0
      %427 = vmatprep.mubr.bf16.mxu0 0
      %428 = vmatmul.mubr.bf16.gmra.mxu0 %v341
      %v429 = vpop.f32.mrf.mxu0
      %v430 = vadd.f32 0.0, %v429
      %v431 = vpop.f32.mrf.mxu0
      %v432 = vpop.f32.mrf.mxu0
      %v433 = vpop.f32.mrf.mxu0
      %434 = vdwg.mxu0
      %v436 = vunpack.c.l.b16 %v220
      %v437 = vpack.c.b16 %v436, %v436
      %v440 = vunpack.c.l.b16 %v221
      %v441 = vunpack.c.l.b16 %v222
      %v442 = vpack.c.b16 %v441, %v440
      %v443 = vsel %vm321, %v253, 0
      %v445 = vsel %vm321, %v254, 0
      %v447 = vsel %vm321, %v255, 0
      %v449 = vsel %vm321, %v256, 0
      %v451 = vsel %vm321, %v257, 0
      %v453 = vsel %vm321, %v258, 0
      %v456 = vsel %vm321, %v437, 0
      %v459 = vsel %vm343, %v442, 0
      %461 = vmatprep.subr.bf16.mxu0 0
      %462 = vmatpush1.bf16.msra.mxu0 0
      %463 = vmatprep.subr.bf16.mxu0 0
      %464 = vmatpush1.bf16.msra.mxu0 0
      %465 = vmatprep.subr.bf16.mxu0 0
      %466 = vmatpush1.bf16.msra.mxu0 0
      %467 = vmatprep.subr.bf16.mxu0 0
      %468 = vmatpush1.bf16.msra.mxu0 0
      %469 = vmatprep.subr.bf16.mxu0 0
      %470 = vmatpush1.bf16.msra.mxu0 0
      %471 = vmatprep.subr.bf16.mxu0 0
      %472 = vmatpush1.bf16.msra.mxu0 0
      %473 = vmatprep.subr.bf16.mxu0 0
      %474 = vmatpush1.bf16.msra.mxu0 0
      %475 = vmatprep.subr.bf16.mxu0 0
      %476 = vmatpush1.bf16.msra.mxu0 %v459
      %477 = vmatprep.subr.bf16.mxu0 0
      %478 = vmatpush2.bf16.msra.mxu0 0
      %479 = vmatprep.subr.bf16.mxu0 0
      %480 = vmatpush2.bf16.msra.mxu0 0
      %481 = vmatprep.subr.bf16.mxu0 0
      %482 = vmatpush2.bf16.msra.mxu0 0
      %483 = vmatprep.subr.bf16.mxu0 0
      %484 = vmatpush2.bf16.msra.mxu0 0
      %485 = vmatprep.subr.bf16.mxu0 0
      %486 = vmatpush2.bf16.msra.mxu0 0
      %487 = vmatprep.subr.bf16.mxu0 0
      %488 = vmatpush2.bf16.msra.mxu0 0
      %489 = vmatprep.subr.bf16.mxu0 0
      %490 = vmatpush2.bf16.msra.mxu0 0
      %491 = vmatprep.subr.bf16.mxu0 0
      %492 = vmatpush2.bf16.msra.mxu0 0
      %493 = vmatprep.mubr.bf16.mxu0 0
      %494 = vmatmul.mubr.bf16.gmra.mxu0 %v443
      %v495 = vpop.f32.mrf.mxu0
      %v496 = vadd.f32 %v382, %v495
      %v497 = vpop.f32.mrf.mxu0
      %v498 = vpop.f32.mrf.mxu0
      %v499 = vadd.f32 %v385, %v498
      %v500 = vpop.f32.mrf.mxu0
      %501 = vmatprep.mubr.bf16.mxu0 0
      %502 = vmatmul.mubr.bf16.gmra.mxu0 %v445
      %v503 = vpop.f32.mrf.mxu0
      %v504 = vadd.f32 %v390, %v503
      %v505 = vpop.f32.mrf.mxu0
      %v506 = vpop.f32.mrf.mxu0
      %v507 = vadd.f32 %v393, %v506
      %v508 = vpop.f32.mrf.mxu0
      %509 = vmatprep.mubr.bf16.mxu0 0
      %510 = vmatmul.mubr.bf16.gmra.mxu0 %v447
      %v511 = vpop.f32.mrf.mxu0
      %v512 = vadd.f32 %v398, %v511
      %v513 = vpop.f32.mrf.mxu0
      %v514 = vpop.f32.mrf.mxu0
      %v515 = vadd.f32 %v401, %v514
      %v516 = vpop.f32.mrf.mxu0
      %517 = vmatprep.mubr.bf16.mxu0 0
      %518 = vmatmul.mubr.bf16.gmra.mxu0 %v449
      %v519 = vpop.f32.mrf.mxu0
      %v520 = vadd.f32 %v406, %v519
      %v521 = vpop.f32.mrf.mxu0
      %v522 = vpop.f32.mrf.mxu0
      %v523 = vadd.f32 %v409, %v522
      %v524 = vpop.f32.mrf.mxu0
      %525 = vmatprep.mubr.bf16.mxu0 0
      %526 = vmatmul.mubr.bf16.gmra.mxu0 %v451
      %v527 = vpop.f32.mrf.mxu0
      %v528 = vadd.f32 %v414, %v527
      %v529 = vpop.f32.mrf.mxu0
      %v530 = vpop.f32.mrf.mxu0
      %v531 = vadd.f32 %v417, %v530
      %v532 = vpop.f32.mrf.mxu0
      %533 = vmatprep.mubr.bf16.mxu0 0
      %534 = vmatmul.mubr.bf16.gmra.mxu0 %v453
      %v535 = vpop.f32.mrf.mxu0
      %v536 = vadd.f32 %v422, %v535
      %v537 = vpop.f32.mrf.mxu0
      %v538 = vpop.f32.mrf.mxu0
      %v539 = vadd.f32 %v425, %v538
      %v540 = vpop.f32.mrf.mxu0
      %541 = vmatprep.mubr.bf16.mxu0 0
      %542 = vmatmul.mubr.bf16.gmra.mxu0 %v456
      %v543 = vpop.f32.mrf.mxu0
      %v544 = vadd.f32 %v430, %v543
      %v545 = vpop.f32.mrf.mxu0
      %v546 = vpop.f32.mrf.mxu0
      %v547 = vpop.f32.mrf.mxu0
      %548 = vdwg.mxu0
      %v549 = vld [vmem:[%s197 + $0x8] sm:$0xf]
      %v550 = vld [vmem:[%s197 + $0xc] sm:$0xf]
      %v551 = vld [vmem:[%s197 + $0x10] sm:$0xf]
      %v552 = vld [vmem:[%s197 + $0x14] sm:$0xf]
      %v553 = vld [vmem:[%s197 + $0x18] sm:$0xf]
      %v554 = vld [vmem:[%s197 + $0x1c] sm:$0xf]
      %v555 = vld [vmem:[%s197 + $0x20] sm:$0xf]
      %v556 = vld [vmem:[%s197 + $0x24] sm:$0xf]
      %v557 = vld [vmem:[%s197 + $0x28] sm:$0xf]
      %v558 = vld [vmem:[%s197 + $0x2c] sm:$0xf]
      %v559 = vld [vmem:[%s197 + $0x30] sm:$0xf]
      %v560 = vld [vmem:[%s197 + $0x34] sm:$0xf]
      %v561 = vld [vmem:[%s197 + $0x38] sm:$0xf]
      %s562 = scalar_lea.vmem %s1, 16
      %v563 = vld [vmem:[%s562] sm:$0xf]
      %v564 = vld [vmem:[%s562 + $0x4] sm:$0x3]
      %v578 = vunpack.c.l.b16 %v549
      %v579 = vunpack.c.l.b16 %v550
      %v580 = vunpack.c.l.b16 %v551
      %v581 = vunpack.c.l.b16 %v552
      %v582 = vunpack.c.l.b16 %v553
      %v583 = vunpack.c.l.b16 %v554
      %v584 = vunpack.c.l.b16 %v555
      %v585 = vunpack.c.l.b16 %v556
      %v586 = vunpack.c.l.b16 %v557
      %v587 = vunpack.c.l.b16 %v558
      %v588 = vunpack.c.l.b16 %v559
      %v589 = vunpack.c.l.b16 %v560
      %v590 = vunpack.c.l.b16 %v561
      %v591 = vpack.c.b16 %v579, %v578
      %v592 = vpack.c.b16 %v581, %v580
      %v593 = vpack.c.b16 %v583, %v582
      %v594 = vpack.c.b16 %v585, %v584
      %v595 = vpack.c.b16 %v587, %v586
      %v596 = vpack.c.b16 %v589, %v588
      %v597 = vpack.c.b16 %v590, %v590
      %v599 = vshrl.u32 %v591, 16
      %v601 = vshll.u32 %v591, 16
      %v603 = vrot.slane %v601, 1
      %v604 = vor.u32 %v599, %v603
      %v606 = vshll.u32 %v592, 16
      %v608 = vrot.slane %v606, 1
      %v609 = vsel %vm260, %v604, %v608
      %v610 = vshrl.u32 %v592, 16
      %v612 = vor.u32 %v610, %v608
      %v614 = vshll.u32 %v593, 16
      %v616 = vrot.slane %v614, 1
      %v617 = vsel %vm260, %v612, %v616
      %v618 = vshrl.u32 %v593, 16
      %v620 = vor.u32 %v618, %v616
      %v622 = vshll.u32 %v594, 16
      %v624 = vrot.slane %v622, 1
      %v625 = vsel %vm260, %v620, %v624
      %v626 = vshrl.u32 %v594, 16
      %v628 = vor.u32 %v626, %v624
      %v630 = vshll.u32 %v595, 16
      %v632 = vrot.slane %v630, 1
      %v633 = vsel %vm260, %v628, %v632
      %v634 = vshrl.u32 %v595, 16
      %v636 = vor.u32 %v634, %v632
      %v638 = vshll.u32 %v596, 16
      %v640 = vrot.slane %v638, 1
      %v641 = vsel %vm260, %v636, %v640
      %v642 = vshrl.u32 %v596, 16
      %v644 = vor.u32 %v642, %v640
      %v646 = vshll.u32 %v597, 16
      %v648 = vrot.slane %v646, 1
      %v649 = vsel %vm260, %v644, %v648
      %v650 = vshrl.u32 %v597, 16
      %v652 = vor.u32 %v650, %v648
      %v655 = vunpack.c.l.b16 %v563
      %v656 = vunpack.c.l.b16 %v564
      %v657 = vpack.c.b16 %v656, %v655
      %v659 = vsel %vm321, %v609, 0
      %v662 = vsel %vm321, %v617, 0
      %v665 = vsel %vm321, %v625, 0
      %v668 = vsel %vm321, %v633, 0
      %v671 = vsel %vm321, %v641, 0
      %v674 = vsel %vm321, %v649, 0
      %v677 = vsel %vm321, %v652, 0
      %v680 = vsel %vm343, %v657, 0
      %682 = vmatprep.subr.bf16.mxu0 0
      %683 = vmatpush1.bf16.msra.mxu0 0
      %684 = vmatprep.subr.bf16.mxu0 0
      %685 = vmatpush1.bf16.msra.mxu0 0
      %686 = vmatprep.subr.bf16.mxu0 0
      %687 = vmatpush1.bf16.msra.mxu0 0
      %688 = vmatprep.subr.bf16.mxu0 0
      %689 = vmatpush1.bf16.msra.mxu0 0
      %690 = vmatprep.subr.bf16.mxu0 0
      %691 = vmatpush1.bf16.msra.mxu0 0
      %692 = vmatprep.subr.bf16.mxu0 0
      %693 = vmatpush1.bf16.msra.mxu0 0
      %694 = vmatprep.subr.bf16.mxu0 0
      %695 = vmatpush1.bf16.msra.mxu0 0
      %696 = vmatprep.subr.bf16.mxu0 0
      %697 = vmatpush1.bf16.msra.mxu0 %v680
      %698 = vmatprep.subr.bf16.mxu0 0
      %699 = vmatpush2.bf16.msra.mxu0 0
      %700 = vmatprep.subr.bf16.mxu0 0
      %701 = vmatpush2.bf16.msra.mxu0 0
      %702 = vmatprep.subr.bf16.mxu0 0
      %703 = vmatpush2.bf16.msra.mxu0 0
      %704 = vmatprep.subr.bf16.mxu0 0
      %705 = vmatpush2.bf16.msra.mxu0 0
      %706 = vmatprep.subr.bf16.mxu0 0
      %707 = vmatpush2.bf16.msra.mxu0 0
      %708 = vmatprep.subr.bf16.mxu0 0
      %709 = vmatpush2.bf16.msra.mxu0 0
      %710 = vmatprep.subr.bf16.mxu0 0
      %711 = vmatpush2.bf16.msra.mxu0 0
      %712 = vmatprep.subr.bf16.mxu0 0
      %713 = vmatpush2.bf16.msra.mxu0 0
      %714 = vmatprep.mubr.bf16.mxu0 0
      %715 = vmatmul.mubr.bf16.gmra.mxu0 %v659
      %v716 = vpop.f32.mrf.mxu0
      %v717 = vadd.f32 0.0, %v716
      %v718 = vpop.f32.mrf.mxu0
      %v719 = vpop.f32.mrf.mxu0
      %v720 = vadd.f32 0.0, %v719
      %v721 = vpop.f32.mrf.mxu0
      %722 = vmatprep.mubr.bf16.mxu0 0
      %723 = vmatmul.mubr.bf16.gmra.mxu0 %v662
      %v724 = vpop.f32.mrf.mxu0
      %v725 = vadd.f32 0.0, %v724
      %v726 = vpop.f32.mrf.mxu0
      %v727 = vpop.f32.mrf.mxu0
      %v728 = vadd.f32 0.0, %v727
      %v729 = vpop.f32.mrf.mxu0
      %730 = vmatprep.mubr.bf16.mxu0 0
      %731 = vmatmul.mubr.bf16.gmra.mxu0 %v665
      %v732 = vpop.f32.mrf.mxu0
      %v733 = vadd.f32 0.0, %v732
      %v734 = vpop.f32.mrf.mxu0
      %v735 = vpop.f32.mrf.mxu0
      %v736 = vadd.f32 0.0, %v735
      %v737 = vpop.f32.mrf.mxu0
      %738 = vmatprep.mubr.bf16.mxu0 0
      %739 = vmatmul.mubr.bf16.gmra.mxu0 %v668
      %v740 = vpop.f32.mrf.mxu0
      %v741 = vadd.f32 0.0, %v740
      %v742 = vpop.f32.mrf.mxu0
      %v743 = vpop.f32.mrf.mxu0
      %v744 = vadd.f32 0.0, %v743
      %v745 = vpop.f32.mrf.mxu0
      %746 = vmatprep.mubr.bf16.mxu0 0
      %747 = vmatmul.mubr.bf16.gmra.mxu0 %v671
      %v748 = vpop.f32.mrf.mxu0
      %v749 = vadd.f32 0.0, %v748
      %v750 = vpop.f32.mrf.mxu0
      %v751 = vpop.f32.mrf.mxu0
      %v752 = vadd.f32 0.0, %v751
      %v753 = vpop.f32.mrf.mxu0
      %754 = vmatprep.mubr.bf16.mxu0 0
      %755 = vmatmul.mubr.bf16.gmra.mxu0 %v674
      %v756 = vpop.f32.mrf.mxu0
      %v757 = vadd.f32 0.0, %v756
      %v758 = vpop.f32.mrf.mxu0
      %v759 = vpop.f32.mrf.mxu0
      %v760 = vadd.f32 0.0, %v759
      %v761 = vpop.f32.mrf.mxu0
      %762 = vmatprep.mubr.bf16.mxu0 0
      %763 = vmatmul.mubr.bf16.gmra.mxu0 %v677
      %v764 = vpop.f32.mrf.mxu0
      %v765 = vadd.f32 0.0, %v764
      %v766 = vpop.f32.mrf.mxu0
      %v767 = vpop.f32.mrf.mxu0
      %v768 = vpop.f32.mrf.mxu0
      %769 = vdwg.mxu0
      %v770 = vadd.f32 %v496, %v717
      %v771 = vadd.f32 %v499, %v720
      %v772 = vadd.f32 %v504, %v725
      %v773 = vadd.f32 %v507, %v728
      %v774 = vadd.f32 %v512, %v733
      %v775 = vadd.f32 %v515, %v736
      %v776 = vadd.f32 %v520, %v741
      %v777 = vadd.f32 %v523, %v744
      %v778 = vadd.f32 %v528, %v749
      %v779 = vadd.f32 %v531, %v752
      %v780 = vadd.f32 %v536, %v757
      %v781 = vadd.f32 %v539, %v760
      %v782 = vadd.f32 %v544, %v765
      %v783 = vld [vmem:[%s197 + $0x8] sm:$0xe]
      %s784 = scalar_lea.vmem %s1, 24
      %v785 = vld [vmem:[%s784] sm:$0xf]
      %v786 = vld [vmem:[%s784 + $0x4] sm:$0x3]
      %v788 = vunpack.c.l.b16 %v783
      %v789 = vpack.c.b16 %v579, %v788
      %vm790 = vcmask 1046528
      %v791 = vrot.slane %v789, 1
      %v792 = vrot.slane %v592, 1
      %v793 = vsel %vm790, %v791, %v792
      %v794 = vrot.slane %v593, 1
      %v795 = vsel %vm790, %v792, %v794
      %v796 = vrot.slane %v594, 1
      %v797 = vsel %vm790, %v794, %v796
      %v798 = vrot.slane %v595, 1
      %v799 = vsel %vm790, %v796, %v798
      %v800 = vrot.slane %v596, 1
      %v801 = vsel %vm790, %v798, %v800
      %v802 = vrot.slane %v597, 1
      %v803 = vsel %vm790, %v800, %v802
      %v806 = vunpack.c.l.b16 %v785
      %v807 = vunpack.c.l.b16 %v786
      %v808 = vpack.c.b16 %v807, %v806
      %v810 = vsel %vm321, %v793, 0
      %v813 = vsel %vm321, %v795, 0
      %v816 = vsel %vm321, %v797, 0
      %v819 = vsel %vm321, %v799, 0
      %v822 = vsel %vm321, %v801, 0
      %v825 = vsel %vm321, %v803, 0
      %v828 = vsel %vm321, %v802, 0
      %v831 = vsel %vm343, %v808, 0
      %833 = vmatprep.subr.bf16.mxu0 0
      %834 = vmatpush1.bf16.msra.mxu0 0
      %835 = vmatprep.subr.bf16.mxu0 0
      %836 = vmatpush1.bf16.msra.mxu0 0
      %837 = vmatprep.subr.bf16.mxu0 0
      %838 = vmatpush1.bf16.msra.mxu0 0
      %839 = vmatprep.subr.bf16.mxu0 0
      %840 = vmatpush1.bf16.msra.mxu0 0
      %841 = vmatprep.subr.bf16.mxu0 0
      %842 = vmatpush1.bf16.msra.mxu0 0
      %843 = vmatprep.subr.bf16.mxu0 0
      %844 = vmatpush1.bf16.msra.mxu0 0
      %845 = vmatprep.subr.bf16.mxu0 0
      %846 = vmatpush1.bf16.msra.mxu0 0
      %847 = vmatprep.subr.bf16.mxu0 0
      %848 = vmatpush1.bf16.msra.mxu0 %v831
      %849 = vmatprep.subr.bf16.mxu0 0
      %850 = vmatpush2.bf16.msra.mxu0 0
      %851 = vmatprep.subr.bf16.mxu0 0
      %852 = vmatpush2.bf16.msra.mxu0 0
      %853 = vmatprep.subr.bf16.mxu0 0
      %854 = vmatpush2.bf16.msra.mxu0 0
      %855 = vmatprep.subr.bf16.mxu0 0
      %856 = vmatpush2.bf16.msra.mxu0 0
      %857 = vmatprep.subr.bf16.mxu0 0
      %858 = vmatpush2.bf16.msra.mxu0 0
      %859 = vmatprep.subr.bf16.mxu0 0
      %860 = vmatpush2.bf16.msra.mxu0 0
      %861 = vmatprep.subr.bf16.mxu0 0
      %862 = vmatpush2.bf16.msra.mxu0 0
      %863 = vmatprep.subr.bf16.mxu0 0
      %864 = vmatpush2.bf16.msra.mxu0 0
      %865 = vmatprep.mubr.bf16.mxu0 0
      %866 = vmatmul.mubr.bf16.gmra.mxu0 %v810
      %v867 = vpop.f32.mrf.mxu0
      %v868 = vadd.f32 0.0, %v867
      %v869 = vpop.f32.mrf.mxu0
      %v870 = vpop.f32.mrf.mxu0
      %v871 = vadd.f32 0.0, %v870
      %v872 = vpop.f32.mrf.mxu0
      %873 = vmatprep.mubr.bf16.mxu0 0
      %874 = vmatmul.mubr.bf16.gmra.mxu0 %v813
      %v875 = vpop.f32.mrf.mxu0
      %v876 = vadd.f32 0.0, %v875
      %v877 = vpop.f32.mrf.mxu0
      %v878 = vpop.f32.mrf.mxu0
      %v879 = vadd.f32 0.0, %v878
      %v880 = vpop.f32.mrf.mxu0
      %881 = vmatprep.mubr.bf16.mxu0 0
      %882 = vmatmul.mubr.bf16.gmra.mxu0 %v816
      %v883 = vpop.f32.mrf.mxu0
      %v884 = vadd.f32 0.0, %v883
      %v885 = vpop.f32.mrf.mxu0
      %v886 = vpop.f32.mrf.mxu0
      %v887 = vadd.f32 0.0, %v886
      %v888 = vpop.f32.mrf.mxu0
      %889 = vmatprep.mubr.bf16.mxu0 0
      %890 = vmatmul.mubr.bf16.gmra.mxu0 %v819
      %v891 = vpop.f32.mrf.mxu0
      %v892 = vadd.f32 0.0, %v891
      %v893 = vpop.f32.mrf.mxu0
      %v894 = vpop.f32.mrf.mxu0
      %v895 = vadd.f32 0.0, %v894
      %v896 = vpop.f32.mrf.mxu0
      %897 = vmatprep.mubr.bf16.mxu0 0
      %898 = vmatmul.mubr.bf16.gmra.mxu0 %v822
      %v899 = vpop.f32.mrf.mxu0
      %v900 = vadd.f32 0.0, %v899
      %v901 = vpop.f32.mrf.mxu0
      %v902 = vpop.f32.mrf.mxu0
      %v903 = vadd.f32 0.0, %v902
      %v904 = vpop.f32.mrf.mxu0
      %905 = vmatprep.mubr.bf16.mxu0 0
      %906 = vmatmul.mubr.bf16.gmra.mxu0 %v825
      %v907 = vpop.f32.mrf.mxu0
      %v908 = vadd.f32 0.0, %v907
      %v909 = vpop.f32.mrf.mxu0
      %v910 = vpop.f32.mrf.mxu0
      %v911 = vadd.f32 0.0, %v910
      %v912 = vpop.f32.mrf.mxu0
      %913 = vmatprep.mubr.bf16.mxu0 0
      %914 = vmatmul.mubr.bf16.gmra.mxu0 %v828
      %v915 = vpop.f32.mrf.mxu0
      %v916 = vadd.f32 0.0, %v915
      %v917 = vpop.f32.mrf.mxu0
      %v918 = vpop.f32.mrf.mxu0
      %v919 = vpop.f32.mrf.mxu0
      %920 = vdwg.mxu0
      %v921 = vadd.f32 %v770, %v868
      %v922 = vadd.f32 %v771, %v871
      %v923 = vadd.f32 %v772, %v876
      %v924 = vadd.f32 %v773, %v879
      %v925 = vadd.f32 %v774, %v884
      %v926 = vadd.f32 %v775, %v887
      %v927 = vadd.f32 %v776, %v892
      %v928 = vadd.f32 %v777, %v895
      %v929 = vadd.f32 %v778, %v900
      %v930 = vadd.f32 %v779, %v903
      %v931 = vadd.f32 %v780, %v908
      %v932 = vadd.f32 %v781, %v911
      %v933 = vadd.f32 %v782, %v916
      %v934 = vld [vmem:[%s2] sm:$0x1]
      %v936 = vlaneseq
      %v937 = vshrl.u32 %v936, 7
      %v938 = vsub.s32 0, %v937
      %v939 = vrot.slane %v934, %v938
      %v941 = vadd.f32 %v921, %v939
      %v942 = vadd.f32 %v922, %v939
      %v943 = vadd.f32 %v923, %v939
      %v944 = vadd.f32 %v924, %v939
      %v945 = vadd.f32 %v925, %v939
      %v946 = vadd.f32 %v926, %v939
      %v947 = vadd.f32 %v927, %v939
      %v948 = vadd.f32 %v928, %v939
      %v949 = vadd.f32 %v929, %v939
      %v950 = vadd.f32 %v930, %v939
      %v951 = vadd.f32 %v931, %v939
      %v952 = vadd.f32 %v932, %v939
      %v953 = vadd.f32 %v933, %v939
      %v954 = vmul.f32 %v941, 0.5
      %v955 = vmul.f32 %v942, 0.5
      %v956 = vmul.f32 %v943, 0.5
      %v957 = vmul.f32 %v944, 0.5
      %v958 = vmul.f32 %v945, 0.5
      %v959 = vmul.f32 %v946, 0.5
      %v960 = vmul.f32 %v947, 0.5
      %v961 = vmul.f32 %v948, 0.5
      %v962 = vmul.f32 %v949, 0.5
      %v963 = vmul.f32 %v950, 0.5
      %v964 = vmul.f32 %v951, 0.5
      %v965 = vmul.f32 %v952, 0.5
      %v966 = vmul.f32 %v953, 0.5
      %v967 = vmul.f32 %v941, 0.044715
      %v968 = vmul.f32 %v942, 0.044715
      %v969 = vmul.f32 %v943, 0.044715
      %v970 = vmul.f32 %v944, 0.044715
      %v971 = vmul.f32 %v945, 0.044715
      %v972 = vmul.f32 %v946, 0.044715
      %v973 = vmul.f32 %v947, 0.044715
      %v974 = vmul.f32 %v948, 0.044715
      %v975 = vmul.f32 %v949, 0.044715
      %v976 = vmul.f32 %v950, 0.044715
      %v977 = vmul.f32 %v951, 0.044715
      %v978 = vmul.f32 %v952, 0.044715
      %v979 = vmul.f32 %v953, 0.044715
      %v980 = vmul.f32 %v967, %v941
      %v981 = vmul.f32 %v968, %v942
      %v982 = vmul.f32 %v969, %v943
      %v983 = vmul.f32 %v970, %v944
      %v984 = vmul.f32 %v971, %v945
      %v985 = vmul.f32 %v972, %v946
      %v986 = vmul.f32 %v973, %v947
      %v987 = vmul.f32 %v974, %v948
      %v988 = vmul.f32 %v975, %v949
      %v989 = vmul.f32 %v976, %v950
      %v990 = vmul.f32 %v977, %v951
      %v991 = vmul.f32 %v978, %v952
      %v992 = vmul.f32 %v979, %v953
      %v993 = vmul.f32 %v980, %v941
      %v994 = vmul.f32 %v981, %v942
      %v995 = vmul.f32 %v982, %v943
      %v996 = vmul.f32 %v983, %v944
      %v997 = vmul.f32 %v984, %v945
      %v998 = vmul.f32 %v985, %v946
      %v999 = vmul.f32 %v986, %v947
      %v1000 = vmul.f32 %v987, %v948
      %v1001 = vmul.f32 %v988, %v949
      %v1002 = vmul.f32 %v989, %v950
      %v1003 = vmul.f32 %v990, %v951
      %v1004 = vmul.f32 %v991, %v952
      %v1005 = vmul.f32 %v992, %v953
      %v1006 = vadd.f32 %v941, %v993
      %v1007 = vadd.f32 %v942, %v994
      %v1008 = vadd.f32 %v943, %v995
      %v1009 = vadd.f32 %v944, %v996
      %v1010 = vadd.f32 %v945, %v997
      %v1011 = vadd.f32 %v946, %v998
      %v1012 = vadd.f32 %v947, %v999
      %v1013 = vadd.f32 %v948, %v1000
      %v1014 = vadd.f32 %v949, %v1001
      %v1015 = vadd.f32 %v950, %v1002
      %v1016 = vadd.f32 %v951, %v1003
      %v1017 = vadd.f32 %v952, %v1004
      %v1018 = vadd.f32 %v953, %v1005
      %v1019 = vmul.f32 %v1006, 0.7978846
      %v1020 = vmul.f32 %v1007, 0.7978846
      %v1021 = vmul.f32 %v1008, 0.7978846
      %v1022 = vmul.f32 %v1009, 0.7978846
      %v1023 = vmul.f32 %v1010, 0.7978846
      %v1024 = vmul.f32 %v1011, 0.7978846
      %v1025 = vmul.f32 %v1012, 0.7978846
      %v1026 = vmul.f32 %v1013, 0.7978846
      %v1027 = vmul.f32 %v1014, 0.7978846
      %v1028 = vmul.f32 %v1015, 0.7978846
      %v1029 = vmul.f32 %v1016, 0.7978846
      %v1030 = vmul.f32 %v1017, 0.7978846
      %v1031 = vmul.f32 %v1018, 0.7978846
      %v1032 = vtanh.pop %v1019
      %v1033 = vtanh.pop %v1020
      %v1034 = vtanh.pop %v1021
      %v1035 = vtanh.pop %v1022
      %v1036 = vtanh.pop %v1023
      %v1037 = vtanh.pop %v1024
      %v1038 = vtanh.pop %v1025
      %v1039 = vtanh.pop %v1026
      %v1040 = vtanh.pop %v1027
      %v1041 = vtanh.pop %v1028
      %v1042 = vtanh.pop %v1029
      %v1043 = vtanh.pop %v1030
      %v1044 = vtanh.pop %v1031
      %v1045 = vadd.f32 %v1032, 1.0
      %v1046 = vadd.f32 %v1033, 1.0
      %v1047 = vadd.f32 %v1034, 1.0
      %v1048 = vadd.f32 %v1035, 1.0
      %v1049 = vadd.f32 %v1036, 1.0
      %v1050 = vadd.f32 %v1037, 1.0
      %v1051 = vadd.f32 %v1038, 1.0
      %v1052 = vadd.f32 %v1039, 1.0
      %v1053 = vadd.f32 %v1040, 1.0
      %v1054 = vadd.f32 %v1041, 1.0
      %v1055 = vadd.f32 %v1042, 1.0
      %v1056 = vadd.f32 %v1043, 1.0
      %v1057 = vadd.f32 %v1044, 1.0
      %v1058 = vmul.f32 %v954, %v1045
      %v1059 = vmul.f32 %v955, %v1046
      %v1060 = vmul.f32 %v956, %v1047
      %v1061 = vmul.f32 %v957, %v1048
      %v1062 = vmul.f32 %v958, %v1049
      %v1063 = vmul.f32 %v959, %v1050
      %v1064 = vmul.f32 %v960, %v1051
      %v1065 = vmul.f32 %v961, %v1052
      %v1066 = vmul.f32 %v962, %v1053
      %v1067 = vmul.f32 %v963, %v1054
      %v1068 = vmul.f32 %v964, %v1055
      %v1069 = vmul.f32 %v965, %v1056
      %v1070 = vmul.f32 %v966, %v1057
      %v1071 = vpack.c.bf16 %v1059, %v1058
      %v1072 = vpack.c.bf16 %v1061, %v1060
      %v1073 = vpack.c.bf16 %v1063, %v1062
      %v1074 = vpack.c.bf16 %v1065, %v1064
      %v1075 = vpack.c.bf16 %v1067, %v1066
      %v1076 = vpack.c.bf16 %v1069, %v1068
      %v1077 = vpack.c.bf16 %v1070, %v1070
      %v1085 = vunpack.c.l.b16 %v1071
      %v1086 = vunpack.c.h.b16 %v1071
      %v1087 = vunpack.c.l.b16 %v1072
      %v1088 = vunpack.c.h.b16 %v1072
      %v1089 = vunpack.c.l.b16 %v1073
      %v1090 = vunpack.c.h.b16 %v1073
      %v1091 = vunpack.c.l.b16 %v1074
      %v1092 = vunpack.c.h.b16 %v1074
      %v1093 = vunpack.c.l.b16 %v1075
      %v1094 = vunpack.c.h.b16 %v1075
      %v1095 = vunpack.c.l.b16 %v1076
      %v1096 = vunpack.c.h.b16 %v1076
      %v1097 = vunpack.c.l.b16 %v1077
      %v1098 = vpack.c.b16 %v1085, %v1085
      %v1099 = vpack.c.b16 %v1086, %v1086
      %v1100 = vpack.c.b16 %v1087, %v1087
      %v1101 = vpack.c.b16 %v1088, %v1088
      %v1102 = vpack.c.b16 %v1089, %v1089
      %v1103 = vpack.c.b16 %v1090, %v1090
      %v1104 = vpack.c.b16 %v1091, %v1091
      %v1105 = vpack.c.b16 %v1092, %v1092
      %v1106 = vpack.c.b16 %v1093, %v1093
      %v1107 = vpack.c.b16 %v1094, %v1094
      %v1108 = vpack.c.b16 %v1095, %v1095
      %v1109 = vpack.c.b16 %v1096, %v1096
      %v1110 = vpack.c.b16 %v1097, %v1097
      %1124 = vst [vmem:[%s206] sm:$0xf] %v1098
      %1125 = vst [vmem:[%s206 + $0x4] sm:$0xf] %v1099
      %1126 = vst [vmem:[%s206 + $0x8] sm:$0xf] %v1100
      %1127 = vst [vmem:[%s206 + $0xc] sm:$0xf] %v1101
      %1128 = vst [vmem:[%s206 + $0x10] sm:$0xf] %v1102
      %1129 = vst [vmem:[%s206 + $0x14] sm:$0xf] %v1103
      %1130 = vst [vmem:[%s206 + $0x18] sm:$0xf] %v1104
      %1131 = vst [vmem:[%s206 + $0x1c] sm:$0xf] %v1105
      %1132 = vst [vmem:[%s206 + $0x20] sm:$0xf] %v1106
      %1133 = vst [vmem:[%s206 + $0x24] sm:$0xf] %v1107
      %1134 = vst [vmem:[%s206 + $0x28] sm:$0xf] %v1108
      %1135 = vst [vmem:[%s206 + $0x2c] sm:$0xf] %v1109
      %1136 = vst [vmem:[%s206 + $0x30] sm:$0x7] %v1110
      %p1137 = scmp.lt.s32.totalorder %s18, 1
      %s1138 = scalar_select %p1137, %s18, 1
      %p1139 = scmp.lt.s32.totalorder %s19, 2
      %s1140 = scalar_select %p1139, %s19, 2
      %s1141 = smul.addr %s1140, 13
      %s1142 = smul.addr %s1138, 39
      %s1143 = sadd.s32 %s1141, %s1142
      %s1144 = smul.addr %s1143, 4
      %s1145 = scalar_lea.vmem %s3, %s1144
      // Predicated region
      $region33: #{tpu_custom_call.1} parent=31 // pred_check
        %p1146 = pneg %p116
      $region34: #{tpu_custom_call.1} parent=31 // pred_check_branch
        %1148 = sbr.rel (%p1146) target = $region36
      $region35: #{tpu_custom_call.1} parent=31 // pred_region
        _
      $region36: #{tpu_custom_call.1} parent=31 // pred_fallthru
        _
    $region32: #{tpu_custom_call.1} parent=5 // pred_fallthru
      _
    %p1149 = scmp.le.s32.totalorder 2, %s9
    // Predicated region
    $region37: #{tpu_custom_call.1} parent=5 // pred_check
      %p1150 = pneg %p1149
    $region38: #{tpu_custom_call.1} parent=5 // pred_check_branch
      %1152 = sbr.rel (%p1150) target = $region40
    $region39: #{tpu_custom_call.1} parent=5 // pred_region
      %s1153 = ssub.s32 %s9, 2
      // Predicated region
      $region41: #{tpu_custom_call.1} parent=39 // pred_check
        %p1154 = pneg %p122
      $region42: #{tpu_custom_call.1} parent=39 // pred_check_branch
        %1156 = sbr.rel (%p1154) target = $region44
      $region43: #{tpu_custom_call.1} parent=39 // pred_region
        %p1157 = scmp.lt.s32.totalorder %s20, 1
        %s1158 = scalar_select %p1157, %s20, 1
        %p1159 = scmp.lt.s32.totalorder %s21, 2
        %s1160 = scalar_select %p1159, %s21, 2
        %s1161 = smul.addr %s1160, 13
        %s1162 = smul.addr %s1158, 39
        %s1163 = sadd.s32 %s1161, %s1162
        %s1164 = smul.addr %s1163, 4
        %s1165 = scalar_lea.vmem %s3, %s1164
      $region44: #{tpu_custom_call.1} parent=39 // pred_fallthru
        _
    $region40: #{tpu_custom_call.1} parent=5 // pred_fallthru
      _
  $region6: #{tpu_custom_call.1} parent=0 // loop_footer
    %s13 = sadd.s32 1, %s9
  $region7: #{tpu_custom_call.1} parent=0 // loop_footer_branch
    %8 = sbr.rel target = $region3
  $region8: #{tpu_custom_call.1} parent=0 // loop_exit
    _

</llo_original>
